<compile_context>
chip_gen: v5e
topology: v5e:2x2
jax: 0.10.0
libtpu: 0.0.40
codegen_flags: <defaults>
</compile_context>

<pallas_src>
import math
import jax
import jax.numpy as jnp
from jax.experimental import pallas as pl
from jax.experimental.pallas import tpu as pltpu

# ---- static model configuration (small, consistent with the module) ----
B, S, D = 2, 8, 32       # batch, seq len, d_model
H = 4                    # attention heads
DK = D // H              # per-head dim
F = 64                   # feed-forward hidden dim (d_ff)
L = 2                    # number of encoder layers
EPS = 1e-6               # LayerNormalization eps


def encoder_kernel(x_ref, mask_ref, wqkv_ref, wo_ref,
                   w1_ref, b1_ref, w2_ref, b2_ref,
                   norms_ref, o_ref, heads_ref):
    # One batch element per program: x is (S, D), fp32 residual stream.
    x = x_ref[0].astype(jnp.float32)

    # Hoisted mask: additive bias computed exactly once per program.
    mask_add = jnp.where(mask_ref[0] == 0.0,
                         jnp.float32(-1e9), jnp.float32(0.0))     # (1, S)
    mask_add = jnp.broadcast_to(mask_add, (S, S))                 # (S, S)

    def layer_norm(v, alpha, bias):
        # PyTorch LayerNormalization: alpha * (x - mean) / (std + eps) + bias
        # torch.std is unbiased (N-1); eps is added to std (not variance).
        mean = jnp.mean(v, axis=-1, keepdims=True)
        diff = v - mean
        var = jnp.sum(diff * diff, axis=-1, keepdims=True) * jnp.float32(1.0 / (D - 1))
        # exact divide (no approx reciprocal) for LayerNorm accuracy
        return alpha * diff / (jnp.sqrt(var) + jnp.float32(EPS)) + bias

    for l in range(L):                         # static unroll over layers
        a1 = norms_ref[4 * l + 0]
        c1 = norms_ref[4 * l + 1]
        a2 = norms_ref[4 * l + 2]
        c2 = norms_ref[4 * l + 3]

        wqkv_l = wqkv_ref[l]                   # (D, 3D) bf16, 1/sqrt(dk) folded into Q cols
        wo_l = wo_ref[l]                       # (D, D)  bf16

        # ---- residual connection 0: multi-head self-attention (pre-norm) ----
        xn = layer_norm(x, a1, c1)
        qkv = jnp.dot(xn.astype(jnp.bfloat16), wqkv_l,
                      preferred_element_type=jnp.float32)         # (S, 3D) f32
        qkv = qkv.astype(jnp.bfloat16)

        for h in range(H):                     # static unroll over heads
            off = h * DK
            qh = qkv[:, off:off + DK]                       # (S, DK)
            kh = qkv[:, D + off:D + off + DK]               # (S, DK)
            vh = qkv[:, 2 * D + off:2 * D + off + DK]       # (S, DK)

            s = jnp.einsum('qd,kd->qk', qh, kh,
                           preferred_element_type=jnp.float32)    # (S, S)
            s = s + mask_add
            s = s - jnp.max(s, axis=-1, keepdims=True)
            p = jnp.exp(s)
            p = p * pl.reciprocal(jnp.sum(p, axis=-1, keepdims=True), approx=True)

            oh = jnp.dot(p.astype(jnp.bfloat16), vh,
                         preferred_element_type=jnp.float32)      # (S, DK)
            # head "concat" via a lane-offset store into VMEM scratch
            heads_ref[:, off:off + DK] = oh

        # single fused W_O matmul over all heads
        attn = jnp.dot(heads_ref[...].astype(jnp.bfloat16), wo_l,
                       preferred_element_type=jnp.float32)        # (S, D)
        x = x + attn                            # dropout == identity (eval)

        # ---- residual connection 1: feed-forward (pre-norm) ----
        xn = layer_norm(x, a2, c2)
        hid = jnp.dot(xn.astype(jnp.bfloat16), w1_ref[l],
                      preferred_element_type=jnp.float32) + b1_ref[l]
        hid = jnp.maximum(hid, 0.0)             # ReLU
        ff = jnp.dot(hid.astype(jnp.bfloat16), w2_ref[l],
                     preferred_element_type=jnp.float32) + b2_ref[l]
        x = x + ff

    # ---- final LayerNormalization (Encoder.norm) ----
    out = layer_norm(x, norms_ref[4 * L], norms_ref[4 * L + 1])
    o_ref[0] = out.astype(o_ref.dtype)


@jax.jit
def encoder_forward(x, mask, params):
    (wqkv, wo, w1, b1, w2, b2, norms) = params

    grid_spec = pltpu.PrefetchScalarGridSpec(
        num_scalar_prefetch=0,
        grid=(B,),                                            # per-batch programs
        in_specs=[
            pl.BlockSpec((1, S, D), lambda b: (b, 0, 0)),     # x
            pl.BlockSpec((1, 1, S), lambda b: (b, 0, 0)),     # mask
            pl.BlockSpec((L, D, 3 * D), lambda b: (0, 0, 0)), # wqkv (bf16)
            pl.BlockSpec((L, D, D), lambda b: (0, 0, 0)),     # wo   (bf16)
            pl.BlockSpec((L, D, F), lambda b: (0, 0, 0)),     # w1   (bf16)
            pl.BlockSpec((L, 1, F), lambda b: (0, 0, 0)),     # b1   (f32)
            pl.BlockSpec((L, F, D), lambda b: (0, 0, 0)),     # w2   (bf16)
            pl.BlockSpec((L, 1, D), lambda b: (0, 0, 0)),     # b2   (f32)
            pl.BlockSpec(memory_space=pltpu.MemorySpace.SMEM),# flat LN scalars (4L+2,)
        ],
        out_specs=pl.BlockSpec((1, S, D), lambda b: (b, 0, 0)),
        scratch_shapes=[pltpu.VMEM((S, D), jnp.float32)],     # head-concat buffer
    )

    out = pl.pallas_call(
        encoder_kernel,
        out_shape=jax.ShapeDtypeStruct((B, S, D), jnp.float32),
        grid_spec=grid_spec,
        compiler_params=pltpu.CompilerParams(
            dimension_semantics=("parallel",)),
    )(x, mask, wqkv, wo, w1, b1, w2, b2, norms)
    return out


def make_params(key):
    ks = jax.random.split(key, 8)
    sc = 0.05
    wq = sc * jax.random.normal(ks[0], (L, D, D), jnp.float32)
    wk = sc * jax.random.normal(ks[1], (L, D, D), jnp.float32)
    wv = sc * jax.random.normal(ks[2], (L, D, D), jnp.float32)
    wo = sc * jax.random.normal(ks[3], (L, D, D), jnp.float32)
    w1 = sc * jax.random.normal(ks[4], (L, D, F), jnp.float32)
    b1 = sc * jax.random.normal(ks[5], (L, 1, F), jnp.float32)
    w2 = sc * jax.random.normal(ks[6], (L, F, D), jnp.float32)
    b2 = sc * jax.random.normal(ks[7], (L, 1, D), jnp.float32)

    # fold the 1/sqrt(d_k) attention score scale into the Q projection (free per call)
    wq = wq * jnp.float32(1.0 / math.sqrt(DK))
    # fuse Q/K/V projection weights: one (D, 3D) matmul per layer
    wqkv = jnp.concatenate([wq, wk, wv], axis=-1)            # (L, D, 3D)

    # bf16 weights for the MXU (kernel accumulates in f32); biases stay f32
    wqkv = wqkv.astype(jnp.bfloat16)
    wo = wo.astype(jnp.bfloat16)
    w1 = w1.astype(jnp.bfloat16)
    w2 = w2.astype(jnp.bfloat16)

    # LayerNormalization params as in __init__: alpha=ones(1), bias=zeros(1)
    # flat layout: per layer [a_norm0, b_norm0, a_norm1, b_norm1], then final [a, b]
    norms = jnp.concatenate(
        [jnp.tile(jnp.array([1.0, 0.0, 1.0, 0.0], jnp.float32), (L,)),
         jnp.array([1.0, 0.0], jnp.float32)])                # (4L + 2,)
    return (wqkv, wo, w1, b1, w2, b2, norms)


if __name__ == "__main__":
    key = jax.random.PRNGKey(0)
    kx, kp = jax.random.split(key)
    x = jax.random.normal(kx, (B, S, D), jnp.float32)
    # mask: batch 0 fully attends, batch 1 has last 2 positions padded out
    mask = jnp.ones((B, 1, S), jnp.float32)
    mask = mask.at[1, 0, S - 2:].set(0.0)
    params = make_params(kp)

    out = encoder_forward(x, mask, params)
    jax.block_until_ready(out)
    assert out.shape == (B, S, D) and out.dtype == jnp.float32
    assert bool(jnp.all(jnp.isfinite(out)))
    print("KERNEL_OK")
</pallas_src>

<mosaic_0001>
module attributes {stable_mosaic.version = 11 : i64} {
  func.func @encoder_kernel(%arg0: i32, %arg1: memref<1x8x32xf32, #tpu.memory_space<vmem>>, %arg2: memref<1x1x8xf32, #tpu.memory_space<vmem>>, %arg3: memref<2x32x96xbf16, #tpu.memory_space<vmem>>, %arg4: memref<2x32x32xbf16, #tpu.memory_space<vmem>>, %arg5: memref<2x32x64xbf16, #tpu.memory_space<vmem>>, %arg6: memref<2x1x64xf32, #tpu.memory_space<vmem>>, %arg7: memref<2x64x32xbf16, #tpu.memory_space<vmem>>, %arg8: memref<2x1x32xf32, #tpu.memory_space<vmem>>, %arg9: memref<10xf32, #tpu.memory_space<smem>>, %arg10: memref<1x8x32xf32, #tpu.memory_space<vmem>>, %arg11: memref<8x32xf32, #tpu.memory_space<vmem>>) attributes {dimension_semantics = [#tpu.dimension_semantics<parallel>], iteration_bounds = array<i64: 2>, scalar_prefetch = 0 : i64, scratch_operands = 1 : i64, tpu.core_type = #tpu.core_type<tc>, window_params = [{transform_indices = @transform_0, window_bounds = array<i64: 1, 8, 32>}, {transform_indices = @transform_1, window_bounds = array<i64: 1, 1, 8>}, {pipeline_mode = #tpu.pipeline_mode<synchronous>, transform_indices = @transform_2, window_bounds = array<i64: 2, 32, 96>}, {pipeline_mode = #tpu.pipeline_mode<synchronous>, transform_indices = @transform_3, window_bounds = array<i64: 2, 32, 32>}, {pipeline_mode = #tpu.pipeline_mode<synchronous>, transform_indices = @transform_4, window_bounds = array<i64: 2, 32, 64>}, {pipeline_mode = #tpu.pipeline_mode<synchronous>, transform_indices = @transform_5, window_bounds = array<i64: 2, 1, 64>}, {pipeline_mode = #tpu.pipeline_mode<synchronous>, transform_indices = @transform_6, window_bounds = array<i64: 2, 64, 32>}, {pipeline_mode = #tpu.pipeline_mode<synchronous>, transform_indices = @transform_7, window_bounds = array<i64: 2, 1, 32>}, {transform_indices = @transform_8, window_bounds = array<i64: 10>}, {transform_indices = @transform_9, window_bounds = array<i64: 1, 8, 32>}]} {
    %c0 = arith.constant 0 : index
    %c0_0 = arith.constant 0 : index
    %c0_1 = arith.constant 0 : index
    %0 = vector.load %arg1[%c0, %c0_0, %c0_1] : memref<1x8x32xf32, #tpu.memory_space<vmem>>, vector<1x8x32xf32>
    %1 = vector.shape_cast %0 : vector<1x8x32xf32> to vector<8x32xf32>
    %c0_2 = arith.constant 0 : index
    %c0_3 = arith.constant 0 : index
    %c0_4 = arith.constant 0 : index
    %2 = vector.load %arg2[%c0_2, %c0_3, %c0_4] : memref<1x1x8xf32, #tpu.memory_space<vmem>>, vector<1x1x8xf32>
    %3 = vector.shape_cast %2 : vector<1x1x8xf32> to vector<1x8xf32>
    %cst = arith.constant 0.000000e+00 : f32
    %4 = vector.broadcast %cst : f32 to vector<1x8xf32>
    %5 = arith.cmpf oeq, %3, %4 : vector<1x8xf32>
    %cst_5 = arith.constant -1.000000e+09 : f32
    %cst_6 = arith.constant 0.000000e+00 : f32
    %6 = vector.broadcast %cst_5 : f32 to vector<1x8xf32>
    %7 = vector.broadcast %cst_6 : f32 to vector<1x8xf32>
    %8 = arith.select %5, %6, %7 : vector<1x8xi1>, vector<1x8xf32>
    %9 = vector.shape_cast %8 : vector<1x8xf32> to vector<1x8xf32>
    %10 = vector.broadcast %9 : vector<1x8xf32> to vector<8x8xf32>
    %c0_7 = arith.constant 0 : index
    %11 = memref.load %arg9[%c0_7] : memref<10xf32, #tpu.memory_space<smem>>
    %c1 = arith.constant 1 : index
    %12 = memref.load %arg9[%c1] : memref<10xf32, #tpu.memory_space<smem>>
    %c2 = arith.constant 2 : index
    %13 = memref.load %arg9[%c2] : memref<10xf32, #tpu.memory_space<smem>>
    %c3 = arith.constant 3 : index
    %14 = memref.load %arg9[%c3] : memref<10xf32, #tpu.memory_space<smem>>
    %c0_8 = arith.constant 0 : index
    %c0_9 = arith.constant 0 : index
    %c0_10 = arith.constant 0 : index
    %15 = vector.load %arg3[%c0_8, %c0_9, %c0_10] : memref<2x32x96xbf16, #tpu.memory_space<vmem>>, vector<1x32x96xbf16>
    %16 = vector.shape_cast %15 : vector<1x32x96xbf16> to vector<32x96xbf16>
    %c0_11 = arith.constant 0 : index
    %c0_12 = arith.constant 0 : index
    %c0_13 = arith.constant 0 : index
    %17 = vector.load %arg4[%c0_11, %c0_12, %c0_13] : memref<2x32x32xbf16, #tpu.memory_space<vmem>>, vector<1x32x32xbf16>
    %18 = vector.shape_cast %17 : vector<1x32x32xbf16> to vector<32x32xbf16>
    %cst_14 = arith.constant dense<0.000000e+00> : vector<8xf32>
    %19 = vector.multi_reduction <add>, %1, %cst_14 [1] : vector<8x32xf32> to vector<8xf32>
    %20 = vector.shape_cast %19 : vector<8xf32> to vector<8x1xf32>
    %cst_15 = arith.constant 3.200000e+01 : f32
    %21 = vector.broadcast %cst_15 : f32 to vector<8x1xf32>
    %22 = arith.divf %20, %21 : vector<8x1xf32>
    %23 = vector.broadcast %22 : vector<8x1xf32> to vector<8x32xf32>
    %24 = arith.subf %1, %23 : vector<8x32xf32>
    %25 = arith.mulf %24, %24 : vector<8x32xf32>
    %cst_16 = arith.constant dense<0.000000e+00> : vector<8xf32>
    %26 = vector.multi_reduction <add>, %25, %cst_16 [1] : vector<8x32xf32> to vector<8xf32>
    %27 = vector.shape_cast %26 : vector<8xf32> to vector<8x1xf32>
    %cst_17 = arith.constant 0.0322580636 : f32
    %28 = vector.broadcast %cst_17 : f32 to vector<8x1xf32>
    %29 = arith.mulf %27, %28 : vector<8x1xf32>
    %30 = vector.broadcast %11 : f32 to vector<8x32xf32>
    %31 = arith.mulf %30, %24 : vector<8x32xf32>
    %32 = math.sqrt %29 : vector<8x1xf32>
    %cst_18 = arith.constant 9.99999997E-7 : f32
    %33 = vector.broadcast %cst_18 : f32 to vector<8x1xf32>
    %34 = arith.addf %32, %33 : vector<8x1xf32>
    %35 = vector.broadcast %34 : vector<8x1xf32> to vector<8x32xf32>
    %36 = arith.divf %31, %35 : vector<8x32xf32>
    %37 = vector.broadcast %12 : f32 to vector<8x32xf32>
    %38 = arith.addf %36, %37 : vector<8x32xf32>
    %39 = arith.truncf %38 : vector<8x32xf32> to vector<8x32xbf16>
    %cst_19 = arith.constant dense<0.000000e+00> : vector<8x96xf32>
    %40 = tpu.matmul %39, %16, %cst_19 {dimension_numbers = #tpu.dot_dimension_numbers<[1], [0], [0], [1], [0, 0, 1, 1], [], []>} : vector<8x32xbf16>, vector<32x96xbf16>, vector<8x96xf32> -> vector<8x96xf32>
    %41 = arith.truncf %40 : vector<8x96xf32> to vector<8x96xbf16>
    %42 = vector.extract_strided_slice %41 {offsets = [0, 0], sizes = [8, 8], strides = [1, 1]} : vector<8x96xbf16> to vector<8x8xbf16>
    %43 = vector.extract_strided_slice %41 {offsets = [0, 32], sizes = [8, 8], strides = [1, 1]} : vector<8x96xbf16> to vector<8x8xbf16>
    %44 = vector.extract_strided_slice %41 {offsets = [0, 64], sizes = [8, 8], strides = [1, 1]} : vector<8x96xbf16> to vector<8x8xbf16>
    "tpu.trace_start"() <{level = 10 : i32, message = "qd,kd->qk"}> : () -> ()
    %cst_20 = arith.constant dense<0.000000e+00> : vector<8x8xf32>
    %45 = tpu.matmul %42, %43, %cst_20 {dimension_numbers = #tpu.dot_dimension_numbers<[1], [1], [0], [0], [0, 0, 1, 0], [], []>} : vector<8x8xbf16>, vector<8x8xbf16>, vector<8x8xf32> -> vector<8x8xf32>
    "tpu.trace_stop"() : () -> ()
    %46 = arith.addf %45, %10 : vector<8x8xf32>
    %cst_21 = arith.constant dense<0xFF800000> : vector<8xf32>
    %47 = vector.multi_reduction <maximumf>, %46, %cst_21 [1] : vector<8x8xf32> to vector<8xf32>
    %48 = vector.shape_cast %47 : vector<8xf32> to vector<8x1xf32>
    %49 = vector.broadcast %48 : vector<8x1xf32> to vector<8x8xf32>
    %50 = arith.subf %46, %49 : vector<8x8xf32>
    %51 = math.exp %50 : vector<8x8xf32>
    %cst_22 = arith.constant dense<0.000000e+00> : vector<8xf32>
    %52 = vector.multi_reduction <add>, %51, %cst_22 [1] : vector<8x8xf32> to vector<8xf32>
    %53 = vector.shape_cast %52 : vector<8xf32> to vector<8x1xf32>
    %54 = tpu.reciprocal %53 {approx = true} : vector<8x1xf32> -> vector<8x1xf32>
    %55 = vector.broadcast %54 : vector<8x1xf32> to vector<8x8xf32>
    %56 = arith.mulf %51, %55 : vector<8x8xf32>
    %57 = arith.truncf %56 : vector<8x8xf32> to vector<8x8xbf16>
    %cst_23 = arith.constant dense<0.000000e+00> : vector<8x8xf32>
    %58 = tpu.matmul %57, %44, %cst_23 {dimension_numbers = #tpu.dot_dimension_numbers<[1], [0], [0], [1], [0, 0, 1, 1], [], []>} : vector<8x8xbf16>, vector<8x8xbf16>, vector<8x8xf32> -> vector<8x8xf32>
    %c0_24 = arith.constant 0 : index
    %c0_25 = arith.constant 0 : index
    %59 = vector.load %arg11[%c0_24, %c0_25] : memref<8x32xf32, #tpu.memory_space<vmem>>, vector<8x8xf32>
    tpu.vector_store %arg11[%c0_24, %c0_25], %58 {strides = array<i32>} : memref<8x32xf32, #tpu.memory_space<vmem>>, vector<8x8xf32>,
    %60 = vector.extract_strided_slice %41 {offsets = [0, 8], sizes = [8, 8], strides = [1, 1]} : vector<8x96xbf16> to vector<8x8xbf16>
    %61 = vector.extract_strided_slice %41 {offsets = [0, 40], sizes = [8, 8], strides = [1, 1]} : vector<8x96xbf16> to vector<8x8xbf16>
    %62 = vector.extract_strided_slice %41 {offsets = [0, 72], sizes = [8, 8], strides = [1, 1]} : vector<8x96xbf16> to vector<8x8xbf16>
    "tpu.trace_start"() <{level = 10 : i32, message = "qd,kd->qk"}> : () -> ()
    %cst_26 = arith.constant dense<0.000000e+00> : vector<8x8xf32>
    %63 = tpu.matmul %60, %61, %cst_26 {dimension_numbers = #tpu.dot_dimension_numbers<[1], [1], [0], [0], [0, 0, 1, 0], [], []>} : vector<8x8xbf16>, vector<8x8xbf16>, vector<8x8xf32> -> vector<8x8xf32>
    "tpu.trace_stop"() : () -> ()
    %64 = arith.addf %63, %10 : vector<8x8xf32>
    %cst_27 = arith.constant dense<0xFF800000> : vector<8xf32>
    %65 = vector.multi_reduction <maximumf>, %64, %cst_27 [1] : vector<8x8xf32> to vector<8xf32>
    %66 = vector.shape_cast %65 : vector<8xf32> to vector<8x1xf32>
    %67 = vector.broadcast %66 : vector<8x1xf32> to vector<8x8xf32>
    %68 = arith.subf %64, %67 : vector<8x8xf32>
    %69 = math.exp %68 : vector<8x8xf32>
    %cst_28 = arith.constant dense<0.000000e+00> : vector<8xf32>
    %70 = vector.multi_reduction <add>, %69, %cst_28 [1] : vector<8x8xf32> to vector<8xf32>
    %71 = vector.shape_cast %70 : vector<8xf32> to vector<8x1xf32>
    %72 = tpu.reciprocal %71 {approx = true} : vector<8x1xf32> -> vector<8x1xf32>
    %73 = vector.broadcast %72 : vector<8x1xf32> to vector<8x8xf32>
    %74 = arith.mulf %69, %73 : vector<8x8xf32>
    %75 = arith.truncf %74 : vector<8x8xf32> to vector<8x8xbf16>
    %cst_29 = arith.constant dense<0.000000e+00> : vector<8x8xf32>
    %76 = tpu.matmul %75, %62, %cst_29 {dimension_numbers = #tpu.dot_dimension_numbers<[1], [0], [0], [1], [0, 0, 1, 1], [], []>} : vector<8x8xbf16>, vector<8x8xbf16>, vector<8x8xf32> -> vector<8x8xf32>
    %c0_30 = arith.constant 0 : index
    %c8 = arith.constant 8 : index
    %77 = vector.load %arg11[%c0_30, %c8] : memref<8x32xf32, #tpu.memory_space<vmem>>, vector<8x8xf32>
    tpu.vector_store %arg11[%c0_30, %c8], %76 {strides = array<i32>} : memref<8x32xf32, #tpu.memory_space<vmem>>, vector<8x8xf32>,
    %78 = vector.extract_strided_slice %41 {offsets = [0, 16], sizes = [8, 8], strides = [1, 1]} : vector<8x96xbf16> to vector<8x8xbf16>
    %79 = vector.extract_strided_slice %41 {offsets = [0, 48], sizes = [8, 8], strides = [1, 1]} : vector<8x96xbf16> to vector<8x8xbf16>
    %80 = vector.extract_strided_slice %41 {offsets = [0, 80], sizes = [8, 8], strides = [1, 1]} : vector<8x96xbf16> to vector<8x8xbf16>
    "tpu.trace_start"() <{level = 10 : i32, message = "qd,kd->qk"}> : () -> ()
    %cst_31 = arith.constant dense<0.000000e+00> : vector<8x8xf32>
    %81 = tpu.matmul %78, %79, %cst_31 {dimension_numbers = #tpu.dot_dimension_numbers<[1], [1], [0], [0], [0, 0, 1, 0], [], []>} : vector<8x8xbf16>, vector<8x8xbf16>, vector<8x8xf32> -> vector<8x8xf32>
    "tpu.trace_stop"() : () -> ()
    %82 = arith.addf %81, %10 : vector<8x8xf32>
    %cst_32 = arith.constant dense<0xFF800000> : vector<8xf32>
    %83 = vector.multi_reduction <maximumf>, %82, %cst_32 [1] : vector<8x8xf32> to vector<8xf32>
    %84 = vector.shape_cast %83 : vector<8xf32> to vector<8x1xf32>
    %85 = vector.broadcast %84 : vector<8x1xf32> to vector<8x8xf32>
    %86 = arith.subf %82, %85 : vector<8x8xf32>
    %87 = math.exp %86 : vector<8x8xf32>
    %cst_33 = arith.constant dense<0.000000e+00> : vector<8xf32>
    %88 = vector.multi_reduction <add>, %87, %cst_33 [1] : vector<8x8xf32> to vector<8xf32>
    %89 = vector.shape_cast %88 : vector<8xf32> to vector<8x1xf32>
    %90 = tpu.reciprocal %89 {approx = true} : vector<8x1xf32> -> vector<8x1xf32>
    %91 = vector.broadcast %90 : vector<8x1xf32> to vector<8x8xf32>
    %92 = arith.mulf %87, %91 : vector<8x8xf32>
    %93 = arith.truncf %92 : vector<8x8xf32> to vector<8x8xbf16>
    %cst_34 = arith.constant dense<0.000000e+00> : vector<8x8xf32>
    %94 = tpu.matmul %93, %80, %cst_34 {dimension_numbers = #tpu.dot_dimension_numbers<[1], [0], [0], [1], [0, 0, 1, 1], [], []>} : vector<8x8xbf16>, vector<8x8xbf16>, vector<8x8xf32> -> vector<8x8xf32>
    %c0_35 = arith.constant 0 : index
    %c16 = arith.constant 16 : index
    %95 = vector.load %arg11[%c0_35, %c16] : memref<8x32xf32, #tpu.memory_space<vmem>>, vector<8x8xf32>
    tpu.vector_store %arg11[%c0_35, %c16], %94 {strides = array<i32>} : memref<8x32xf32, #tpu.memory_space<vmem>>, vector<8x8xf32>,
    %96 = vector.extract_strided_slice %41 {offsets = [0, 24], sizes = [8, 8], strides = [1, 1]} : vector<8x96xbf16> to vector<8x8xbf16>
    %97 = vector.extract_strided_slice %41 {offsets = [0, 56], sizes = [8, 8], strides = [1, 1]} : vector<8x96xbf16> to vector<8x8xbf16>
    %98 = vector.extract_strided_slice %41 {offsets = [0, 88], sizes = [8, 8], strides = [1, 1]} : vector<8x96xbf16> to vector<8x8xbf16>
    "tpu.trace_start"() <{level = 10 : i32, message = "qd,kd->qk"}> : () -> ()
    %cst_36 = arith.constant dense<0.000000e+00> : vector<8x8xf32>
    %99 = tpu.matmul %96, %97, %cst_36 {dimension_numbers = #tpu.dot_dimension_numbers<[1], [1], [0], [0], [0, 0, 1, 0], [], []>} : vector<8x8xbf16>, vector<8x8xbf16>, vector<8x8xf32> -> vector<8x8xf32>
    "tpu.trace_stop"() : () -> ()
    %100 = arith.addf %99, %10 : vector<8x8xf32>
    %cst_37 = arith.constant dense<0xFF800000> : vector<8xf32>
    %101 = vector.multi_reduction <maximumf>, %100, %cst_37 [1] : vector<8x8xf32> to vector<8xf32>
    %102 = vector.shape_cast %101 : vector<8xf32> to vector<8x1xf32>
    %103 = vector.broadcast %102 : vector<8x1xf32> to vector<8x8xf32>
    %104 = arith.subf %100, %103 : vector<8x8xf32>
    %105 = math.exp %104 : vector<8x8xf32>
    %cst_38 = arith.constant dense<0.000000e+00> : vector<8xf32>
    %106 = vector.multi_reduction <add>, %105, %cst_38 [1] : vector<8x8xf32> to vector<8xf32>
    %107 = vector.shape_cast %106 : vector<8xf32> to vector<8x1xf32>
    %108 = tpu.reciprocal %107 {approx = true} : vector<8x1xf32> -> vector<8x1xf32>
    %109 = vector.broadcast %108 : vector<8x1xf32> to vector<8x8xf32>
    %110 = arith.mulf %105, %109 : vector<8x8xf32>
    %111 = arith.truncf %110 : vector<8x8xf32> to vector<8x8xbf16>
    %cst_39 = arith.constant dense<0.000000e+00> : vector<8x8xf32>
    %112 = tpu.matmul %111, %98, %cst_39 {dimension_numbers = #tpu.dot_dimension_numbers<[1], [0], [0], [1], [0, 0, 1, 1], [], []>} : vector<8x8xbf16>, vector<8x8xbf16>, vector<8x8xf32> -> vector<8x8xf32>
    %c0_40 = arith.constant 0 : index
    %c24 = arith.constant 24 : index
    %113 = vector.load %arg11[%c0_40, %c24] : memref<8x32xf32, #tpu.memory_space<vmem>>, vector<8x8xf32>
    tpu.vector_store %arg11[%c0_40, %c24], %112 {strides = array<i32>} : memref<8x32xf32, #tpu.memory_space<vmem>>, vector<8x8xf32>,
    %c0_41 = arith.constant 0 : index
    %c0_42 = arith.constant 0 : index
    %114 = vector.load %arg11[%c0_41, %c0_42] : memref<8x32xf32, #tpu.memory_space<vmem>>, vector<8x32xf32>
    %115 = arith.truncf %114 : vector<8x32xf32> to vector<8x32xbf16>
    %cst_43 = arith.constant dense<0.000000e+00> : vector<8x32xf32>
    %116 = tpu.matmul %115, %18, %cst_43 {dimension_numbers = #tpu.dot_dimension_numbers<[1], [0], [0], [1], [0, 0, 1, 1], [], []>} : vector<8x32xbf16>, vector<32x32xbf16>, vector<8x32xf32> -> vector<8x32xf32>
    %117 = arith.addf %1, %116 : vector<8x32xf32>
    %cst_44 = arith.constant dense<0.000000e+00> : vector<8xf32>
    %118 = vector.multi_reduction <add>, %117, %cst_44 [1] : vector<8x32xf32> to vector<8xf32>
    %119 = vector.shape_cast %118 : vector<8xf32> to vector<8x1xf32>
    %cst_45 = arith.constant 3.200000e+01 : f32
    %120 = vector.broadcast %cst_45 : f32 to vector<8x1xf32>
    %121 = arith.divf %119, %120 : vector<8x1xf32>
    %122 = vector.broadcast %121 : vector<8x1xf32> to vector<8x32xf32>
    %123 = arith.subf %117, %122 : vector<8x32xf32>
    %124 = arith.mulf %123, %123 : vector<8x32xf32>
    %cst_46 = arith.constant dense<0.000000e+00> : vector<8xf32>
    %125 = vector.multi_reduction <add>, %124, %cst_46 [1] : vector<8x32xf32> to vector<8xf32>
    %126 = vector.shape_cast %125 : vector<8xf32> to vector<8x1xf32>
    %cst_47 = arith.constant 0.0322580636 : f32
    %127 = vector.broadcast %cst_47 : f32 to vector<8x1xf32>
    %128 = arith.mulf %126, %127 : vector<8x1xf32>
    %129 = vector.broadcast %13 : f32 to vector<8x32xf32>
    %130 = arith.mulf %129, %123 : vector<8x32xf32>
    %131 = math.sqrt %128 : vector<8x1xf32>
    %cst_48 = arith.constant 9.99999997E-7 : f32
    %132 = vector.broadcast %cst_48 : f32 to vector<8x1xf32>
    %133 = arith.addf %131, %132 : vector<8x1xf32>
    %134 = vector.broadcast %133 : vector<8x1xf32> to vector<8x32xf32>
    %135 = arith.divf %130, %134 : vector<8x32xf32>
    %136 = vector.broadcast %14 : f32 to vector<8x32xf32>
    %137 = arith.addf %135, %136 : vector<8x32xf32>
    %138 = arith.truncf %137 : vector<8x32xf32> to vector<8x32xbf16>
    %c0_49 = arith.constant 0 : index
    %c0_50 = arith.constant 0 : index
    %c0_51 = arith.constant 0 : index
    %139 = vector.load %arg5[%c0_49, %c0_50, %c0_51] : memref<2x32x64xbf16, #tpu.memory_space<vmem>>, vector<1x32x64xbf16>
    %140 = vector.shape_cast %139 : vector<1x32x64xbf16> to vector<32x64xbf16>
    %cst_52 = arith.constant dense<0.000000e+00> : vector<8x64xf32>
    %141 = tpu.matmul %138, %140, %cst_52 {dimension_numbers = #tpu.dot_dimension_numbers<[1], [0], [0], [1], [0, 0, 1, 1], [], []>} : vector<8x32xbf16>, vector<32x64xbf16>, vector<8x64xf32> -> vector<8x64xf32>
    %c0_53 = arith.constant 0 : index
    %c0_54 = arith.constant 0 : index
    %c0_55 = arith.constant 0 : index
    %142 = vector.load %arg6[%c0_53, %c0_54, %c0_55] : memref<2x1x64xf32, #tpu.memory_space<vmem>>, vector<1x1x64xf32>
    %143 = vector.shape_cast %142 : vector<1x1x64xf32> to vector<1x64xf32>
    %144 = vector.broadcast %143 : vector<1x64xf32> to vector<8x64xf32>
    %145 = arith.addf %141, %144 : vector<8x64xf32>
    %cst_56 = arith.constant 0.000000e+00 : f32
    %146 = vector.broadcast %cst_56 : f32 to vector<8x64xf32>
    %147 = arith.maximumf %145, %146 : vector<8x64xf32>
    %148 = arith.truncf %147 : vector<8x64xf32> to vector<8x64xbf16>
    %c0_57 = arith.constant 0 : index
    %c0_58 = arith.constant 0 : index
    %c0_59 = arith.constant 0 : index
    %149 = vector.load %arg7[%c0_57, %c0_58, %c0_59] : memref<2x64x32xbf16, #tpu.memory_space<vmem>>, vector<1x64x32xbf16>
    %150 = vector.shape_cast %149 : vector<1x64x32xbf16> to vector<64x32xbf16>
    %cst_60 = arith.constant dense<0.000000e+00> : vector<8x32xf32>
    %151 = tpu.matmul %148, %150, %cst_60 {dimension_numbers = #tpu.dot_dimension_numbers<[1], [0], [0], [1], [0, 0, 1, 1], [], []>} : vector<8x64xbf16>, vector<64x32xbf16>, vector<8x32xf32> -> vector<8x32xf32>
    %c0_61 = arith.constant 0 : index
    %c0_62 = arith.constant 0 : index
    %c0_63 = arith.constant 0 : index
    %152 = vector.load %arg8[%c0_61, %c0_62, %c0_63] : memref<2x1x32xf32, #tpu.memory_space<vmem>>, vector<1x1x32xf32>
    %153 = vector.shape_cast %152 : vector<1x1x32xf32> to vector<1x32xf32>
    %154 = vector.broadcast %153 : vector<1x32xf32> to vector<8x32xf32>
    %155 = arith.addf %151, %154 : vector<8x32xf32>
    %156 = arith.addf %117, %155 : vector<8x32xf32>
    %c4 = arith.constant 4 : index
    %157 = memref.load %arg9[%c4] : memref<10xf32, #tpu.memory_space<smem>>
    %c5 = arith.constant 5 : index
    %158 = memref.load %arg9[%c5] : memref<10xf32, #tpu.memory_space<smem>>
    %c6 = arith.constant 6 : index
    %159 = memref.load %arg9[%c6] : memref<10xf32, #tpu.memory_space<smem>>
    %c7 = arith.constant 7 : index
    %160 = memref.load %arg9[%c7] : memref<10xf32, #tpu.memory_space<smem>>
    %c1_64 = arith.constant 1 : index
    %c0_65 = arith.constant 0 : index
    %c0_66 = arith.constant 0 : index
    %161 = vector.load %arg3[%c1_64, %c0_65, %c0_66] : memref<2x32x96xbf16, #tpu.memory_space<vmem>>, vector<1x32x96xbf16>
    %162 = vector.shape_cast %161 : vector<1x32x96xbf16> to vector<32x96xbf16>
    %c1_67 = arith.constant 1 : index
    %c0_68 = arith.constant 0 : index
    %c0_69 = arith.constant 0 : index
    %163 = vector.load %arg4[%c1_67, %c0_68, %c0_69] : memref<2x32x32xbf16, #tpu.memory_space<vmem>>, vector<1x32x32xbf16>
    %164 = vector.shape_cast %163 : vector<1x32x32xbf16> to vector<32x32xbf16>
    %cst_70 = arith.constant dense<0.000000e+00> : vector<8xf32>
    %165 = vector.multi_reduction <add>, %156, %cst_70 [1] : vector<8x32xf32> to vector<8xf32>
    %166 = vector.shape_cast %165 : vector<8xf32> to vector<8x1xf32>
    %cst_71 = arith.constant 3.200000e+01 : f32
    %167 = vector.broadcast %cst_71 : f32 to vector<8x1xf32>
    %168 = arith.divf %166, %167 : vector<8x1xf32>
    %169 = vector.broadcast %168 : vector<8x1xf32> to vector<8x32xf32>
    %170 = arith.subf %156, %169 : vector<8x32xf32>
    %171 = arith.mulf %170, %170 : vector<8x32xf32>
    %cst_72 = arith.constant dense<0.000000e+00> : vector<8xf32>
    %172 = vector.multi_reduction <add>, %171, %cst_72 [1] : vector<8x32xf32> to vector<8xf32>
    %173 = vector.shape_cast %172 : vector<8xf32> to vector<8x1xf32>
    %cst_73 = arith.constant 0.0322580636 : f32
    %174 = vector.broadcast %cst_73 : f32 to vector<8x1xf32>
    %175 = arith.mulf %173, %174 : vector<8x1xf32>
    %176 = vector.broadcast %157 : f32 to vector<8x32xf32>
    %177 = arith.mulf %176, %170 : vector<8x32xf32>
    %178 = math.sqrt %175 : vector<8x1xf32>
    %cst_74 = arith.constant 9.99999997E-7 : f32
    %179 = vector.broadcast %cst_74 : f32 to vector<8x1xf32>
    %180 = arith.addf %178, %179 : vector<8x1xf32>
    %181 = vector.broadcast %180 : vector<8x1xf32> to vector<8x32xf32>
    %182 = arith.divf %177, %181 : vector<8x32xf32>
    %183 = vector.broadcast %158 : f32 to vector<8x32xf32>
    %184 = arith.addf %182, %183 : vector<8x32xf32>
    %185 = arith.truncf %184 : vector<8x32xf32> to vector<8x32xbf16>
    %cst_75 = arith.constant dense<0.000000e+00> : vector<8x96xf32>
    %186 = tpu.matmul %185, %162, %cst_75 {dimension_numbers = #tpu.dot_dimension_numbers<[1], [0], [0], [1], [0, 0, 1, 1], [], []>} : vector<8x32xbf16>, vector<32x96xbf16>, vector<8x96xf32> -> vector<8x96xf32>
    %187 = arith.truncf %186 : vector<8x96xf32> to vector<8x96xbf16>
    %188 = vector.extract_strided_slice %187 {offsets = [0, 0], sizes = [8, 8], strides = [1, 1]} : vector<8x96xbf16> to vector<8x8xbf16>
    %189 = vector.extract_strided_slice %187 {offsets = [0, 32], sizes = [8, 8], strides = [1, 1]} : vector<8x96xbf16> to vector<8x8xbf16>
    %190 = vector.extract_strided_slice %187 {offsets = [0, 64], sizes = [8, 8], strides = [1, 1]} : vector<8x96xbf16> to vector<8x8xbf16>
    "tpu.trace_start"() <{level = 10 : i32, message = "qd,kd->qk"}> : () -> ()
    %cst_76 = arith.constant dense<0.000000e+00> : vector<8x8xf32>
    %191 = tpu.matmul %188, %189, %cst_76 {dimension_numbers = #tpu.dot_dimension_numbers<[1], [1], [0], [0], [0, 0, 1, 0], [], []>} : vector<8x8xbf16>, vector<8x8xbf16>, vector<8x8xf32> -> vector<8x8xf32>
    "tpu.trace_stop"() : () -> ()
    %192 = arith.addf %191, %10 : vector<8x8xf32>
    %cst_77 = arith.constant dense<0xFF800000> : vector<8xf32>
    %193 = vector.multi_reduction <maximumf>, %192, %cst_77 [1] : vector<8x8xf32> to vector<8xf32>
    %194 = vector.shape_cast %193 : vector<8xf32> to vector<8x1xf32>
    %195 = vector.broadcast %194 : vector<8x1xf32> to vector<8x8xf32>
    %196 = arith.subf %192, %195 : vector<8x8xf32>
    %197 = math.exp %196 : vector<8x8xf32>
    %cst_78 = arith.constant dense<0.000000e+00> : vector<8xf32>
    %198 = vector.multi_reduction <add>, %197, %cst_78 [1] : vector<8x8xf32> to vector<8xf32>
    %199 = vector.shape_cast %198 : vector<8xf32> to vector<8x1xf32>
    %200 = tpu.reciprocal %199 {approx = true} : vector<8x1xf32> -> vector<8x1xf32>
    %201 = vector.broadcast %200 : vector<8x1xf32> to vector<8x8xf32>
    %202 = arith.mulf %197, %201 : vector<8x8xf32>
    %203 = arith.truncf %202 : vector<8x8xf32> to vector<8x8xbf16>
    %cst_79 = arith.constant dense<0.000000e+00> : vector<8x8xf32>
    %204 = tpu.matmul %203, %190, %cst_79 {dimension_numbers = #tpu.dot_dimension_numbers<[1], [0], [0], [1], [0, 0, 1, 1], [], []>} : vector<8x8xbf16>, vector<8x8xbf16>, vector<8x8xf32> -> vector<8x8xf32>
    %c0_80 = arith.constant 0 : index
    %c0_81 = arith.constant 0 : index
    %205 = vector.load %arg11[%c0_80, %c0_81] : memref<8x32xf32, #tpu.memory_space<vmem>>, vector<8x8xf32>
    tpu.vector_store %arg11[%c0_80, %c0_81], %204 {strides = array<i32>} : memref<8x32xf32, #tpu.memory_space<vmem>>, vector<8x8xf32>,
    %206 = vector.extract_strided_slice %187 {offsets = [0, 8], sizes = [8, 8], strides = [1, 1]} : vector<8x96xbf16> to vector<8x8xbf16>
    %207 = vector.extract_strided_slice %187 {offsets = [0, 40], sizes = [8, 8], strides = [1, 1]} : vector<8x96xbf16> to vector<8x8xbf16>
    %208 = vector.extract_strided_slice %187 {offsets = [0, 72], sizes = [8, 8], strides = [1, 1]} : vector<8x96xbf16> to vector<8x8xbf16>
    "tpu.trace_start"() <{level = 10 : i32, message = "qd,kd->qk"}> : () -> ()
    %cst_82 = arith.constant dense<0.000000e+00> : vector<8x8xf32>
    %209 = tpu.matmul %206, %207, %cst_82 {dimension_numbers = #tpu.dot_dimension_numbers<[1], [1], [0], [0], [0, 0, 1, 0], [], []>} : vector<8x8xbf16>, vector<8x8xbf16>, vector<8x8xf32> -> vector<8x8xf32>
    "tpu.trace_stop"() : () -> ()
    %210 = arith.addf %209, %10 : vector<8x8xf32>
    %cst_83 = arith.constant dense<0xFF800000> : vector<8xf32>
    %211 = vector.multi_reduction <maximumf>, %210, %cst_83 [1] : vector<8x8xf32> to vector<8xf32>
    %212 = vector.shape_cast %211 : vector<8xf32> to vector<8x1xf32>
    %213 = vector.broadcast %212 : vector<8x1xf32> to vector<8x8xf32>
    %214 = arith.subf %210, %213 : vector<8x8xf32>
    %215 = math.exp %214 : vector<8x8xf32>
    %cst_84 = arith.constant dense<0.000000e+00> : vector<8xf32>
    %216 = vector.multi_reduction <add>, %215, %cst_84 [1] : vector<8x8xf32> to vector<8xf32>
    %217 = vector.shape_cast %216 : vector<8xf32> to vector<8x1xf32>
    %218 = tpu.reciprocal %217 {approx = true} : vector<8x1xf32> -> vector<8x1xf32>
    %219 = vector.broadcast %218 : vector<8x1xf32> to vector<8x8xf32>
    %220 = arith.mulf %215, %219 : vector<8x8xf32>
    %221 = arith.truncf %220 : vector<8x8xf32> to vector<8x8xbf16>
    %cst_85 = arith.constant dense<0.000000e+00> : vector<8x8xf32>
    %222 = tpu.matmul %221, %208, %cst_85 {dimension_numbers = #tpu.dot_dimension_numbers<[1], [0], [0], [1], [0, 0, 1, 1], [], []>} : vector<8x8xbf16>, vector<8x8xbf16>, vector<8x8xf32> -> vector<8x8xf32>
    %c0_86 = arith.constant 0 : index
    %c8_87 = arith.constant 8 : index
    %223 = vector.load %arg11[%c0_86, %c8_87] : memref<8x32xf32, #tpu.memory_space<vmem>>, vector<8x8xf32>
    tpu.vector_store %arg11[%c0_86, %c8_87], %222 {strides = array<i32>} : memref<8x32xf32, #tpu.memory_space<vmem>>, vector<8x8xf32>,
    %224 = vector.extract_strided_slice %187 {offsets = [0, 16], sizes = [8, 8], strides = [1, 1]} : vector<8x96xbf16> to vector<8x8xbf16>
    %225 = vector.extract_strided_slice %187 {offsets = [0, 48], sizes = [8, 8], strides = [1, 1]} : vector<8x96xbf16> to vector<8x8xbf16>
    %226 = vector.extract_strided_slice %187 {offsets = [0, 80], sizes = [8, 8], strides = [1, 1]} : vector<8x96xbf16> to vector<8x8xbf16>
    "tpu.trace_start"() <{level = 10 : i32, message = "qd,kd->qk"}> : () -> ()
    %cst_88 = arith.constant dense<0.000000e+00> : vector<8x8xf32>
    %227 = tpu.matmul %224, %225, %cst_88 {dimension_numbers = #tpu.dot_dimension_numbers<[1], [1], [0], [0], [0, 0, 1, 0], [], []>} : vector<8x8xbf16>, vector<8x8xbf16>, vector<8x8xf32> -> vector<8x8xf32>
    "tpu.trace_stop"() : () -> ()
    %228 = arith.addf %227, %10 : vector<8x8xf32>
    %cst_89 = arith.constant dense<0xFF800000> : vector<8xf32>
    %229 = vector.multi_reduction <maximumf>, %228, %cst_89 [1] : vector<8x8xf32> to vector<8xf32>
    %230 = vector.shape_cast %229 : vector<8xf32> to vector<8x1xf32>
    %231 = vector.broadcast %230 : vector<8x1xf32> to vector<8x8xf32>
    %232 = arith.subf %228, %231 : vector<8x8xf32>
    %233 = math.exp %232 : vector<8x8xf32>
    %cst_90 = arith.constant dense<0.000000e+00> : vector<8xf32>
    %234 = vector.multi_reduction <add>, %233, %cst_90 [1] : vector<8x8xf32> to vector<8xf32>
    %235 = vector.shape_cast %234 : vector<8xf32> to vector<8x1xf32>
    %236 = tpu.reciprocal %235 {approx = true} : vector<8x1xf32> -> vector<8x1xf32>
    %237 = vector.broadcast %236 : vector<8x1xf32> to vector<8x8xf32>
    %238 = arith.mulf %233, %237 : vector<8x8xf32>
    %239 = arith.truncf %238 : vector<8x8xf32> to vector<8x8xbf16>
    %cst_91 = arith.constant dense<0.000000e+00> : vector<8x8xf32>
    %240 = tpu.matmul %239, %226, %cst_91 {dimension_numbers = #tpu.dot_dimension_numbers<[1], [0], [0], [1], [0, 0, 1, 1], [], []>} : vector<8x8xbf16>, vector<8x8xbf16>, vector<8x8xf32> -> vector<8x8xf32>
    %c0_92 = arith.constant 0 : index
    %c16_93 = arith.constant 16 : index
    %241 = vector.load %arg11[%c0_92, %c16_93] : memref<8x32xf32, #tpu.memory_space<vmem>>, vector<8x8xf32>
    tpu.vector_store %arg11[%c0_92, %c16_93], %240 {strides = array<i32>} : memref<8x32xf32, #tpu.memory_space<vmem>>, vector<8x8xf32>,
    %242 = vector.extract_strided_slice %187 {offsets = [0, 24], sizes = [8, 8], strides = [1, 1]} : vector<8x96xbf16> to vector<8x8xbf16>
    %243 = vector.extract_strided_slice %187 {offsets = [0, 56], sizes = [8, 8], strides = [1, 1]} : vector<8x96xbf16> to vector<8x8xbf16>
    %244 = vector.extract_strided_slice %187 {offsets = [0, 88], sizes = [8, 8], strides = [1, 1]} : vector<8x96xbf16> to vector<8x8xbf16>
    "tpu.trace_start"() <{level = 10 : i32, message = "qd,kd->qk"}> : () -> ()
    %cst_94 = arith.constant dense<0.000000e+00> : vector<8x8xf32>
    %245 = tpu.matmul %242, %243, %cst_94 {dimension_numbers = #tpu.dot_dimension_numbers<[1], [1], [0], [0], [0, 0, 1, 0], [], []>} : vector<8x8xbf16>, vector<8x8xbf16>, vector<8x8xf32> -> vector<8x8xf32>
    "tpu.trace_stop"() : () -> ()
    %246 = arith.addf %245, %10 : vector<8x8xf32>
    %cst_95 = arith.constant dense<0xFF800000> : vector<8xf32>
    %247 = vector.multi_reduction <maximumf>, %246, %cst_95 [1] : vector<8x8xf32> to vector<8xf32>
    %248 = vector.shape_cast %247 : vector<8xf32> to vector<8x1xf32>
    %249 = vector.broadcast %248 : vector<8x1xf32> to vector<8x8xf32>
    %250 = arith.subf %246, %249 : vector<8x8xf32>
    %251 = math.exp %250 : vector<8x8xf32>
    %cst_96 = arith.constant dense<0.000000e+00> : vector<8xf32>
    %252 = vector.multi_reduction <add>, %251, %cst_96 [1] : vector<8x8xf32> to vector<8xf32>
    %253 = vector.shape_cast %252 : vector<8xf32> to vector<8x1xf32>
    %254 = tpu.reciprocal %253 {approx = true} : vector<8x1xf32> -> vector<8x1xf32>
    %255 = vector.broadcast %254 : vector<8x1xf32> to vector<8x8xf32>
    %256 = arith.mulf %251, %255 : vector<8x8xf32>
    %257 = arith.truncf %256 : vector<8x8xf32> to vector<8x8xbf16>
    %cst_97 = arith.constant dense<0.000000e+00> : vector<8x8xf32>
    %258 = tpu.matmul %257, %244, %cst_97 {dimension_numbers = #tpu.dot_dimension_numbers<[1], [0], [0], [1], [0, 0, 1, 1], [], []>} : vector<8x8xbf16>, vector<8x8xbf16>, vector<8x8xf32> -> vector<8x8xf32>
    %c0_98 = arith.constant 0 : index
    %c24_99 = arith.constant 24 : index
    %259 = vector.load %arg11[%c0_98, %c24_99] : memref<8x32xf32, #tpu.memory_space<vmem>>, vector<8x8xf32>
    tpu.vector_store %arg11[%c0_98, %c24_99], %258 {strides = array<i32>} : memref<8x32xf32, #tpu.memory_space<vmem>>, vector<8x8xf32>,
    %c0_100 = arith.constant 0 : index
    %c0_101 = arith.constant 0 : index
    %260 = vector.load %arg11[%c0_100, %c0_101] : memref<8x32xf32, #tpu.memory_space<vmem>>, vector<8x32xf32>
    %261 = arith.truncf %260 : vector<8x32xf32> to vector<8x32xbf16>
    %cst_102 = arith.constant dense<0.000000e+00> : vector<8x32xf32>
    %262 = tpu.matmul %261, %164, %cst_102 {dimension_numbers = #tpu.dot_dimension_numbers<[1], [0], [0], [1], [0, 0, 1, 1], [], []>} : vector<8x32xbf16>, vector<32x32xbf16>, vector<8x32xf32> -> vector<8x32xf32>
    %263 = arith.addf %156, %262 : vector<8x32xf32>
    %cst_103 = arith.constant dense<0.000000e+00> : vector<8xf32>
    %264 = vector.multi_reduction <add>, %263, %cst_103 [1] : vector<8x32xf32> to vector<8xf32>
    %265 = vector.shape_cast %264 : vector<8xf32> to vector<8x1xf32>
    %cst_104 = arith.constant 3.200000e+01 : f32
    %266 = vector.broadcast %cst_104 : f32 to vector<8x1xf32>
    %267 = arith.divf %265, %266 : vector<8x1xf32>
    %268 = vector.broadcast %267 : vector<8x1xf32> to vector<8x32xf32>
    %269 = arith.subf %263, %268 : vector<8x32xf32>
    %270 = arith.mulf %269, %269 : vector<8x32xf32>
    %cst_105 = arith.constant dense<0.000000e+00> : vector<8xf32>
    %271 = vector.multi_reduction <add>, %270, %cst_105 [1] : vector<8x32xf32> to vector<8xf32>
    %272 = vector.shape_cast %271 : vector<8xf32> to vector<8x1xf32>
    %cst_106 = arith.constant 0.0322580636 : f32
    %273 = vector.broadcast %cst_106 : f32 to vector<8x1xf32>
    %274 = arith.mulf %272, %273 : vector<8x1xf32>
    %275 = vector.broadcast %159 : f32 to vector<8x32xf32>
    %276 = arith.mulf %275, %269 : vector<8x32xf32>
    %277 = math.sqrt %274 : vector<8x1xf32>
    %cst_107 = arith.constant 9.99999997E-7 : f32
    %278 = vector.broadcast %cst_107 : f32 to vector<8x1xf32>
    %279 = arith.addf %277, %278 : vector<8x1xf32>
    %280 = vector.broadcast %279 : vector<8x1xf32> to vector<8x32xf32>
    %281 = arith.divf %276, %280 : vector<8x32xf32>
    %282 = vector.broadcast %160 : f32 to vector<8x32xf32>
    %283 = arith.addf %281, %282 : vector<8x32xf32>
    %284 = arith.truncf %283 : vector<8x32xf32> to vector<8x32xbf16>
    %c1_108 = arith.constant 1 : index
    %c0_109 = arith.constant 0 : index
    %c0_110 = arith.constant 0 : index
    %285 = vector.load %arg5[%c1_108, %c0_109, %c0_110] : memref<2x32x64xbf16, #tpu.memory_space<vmem>>, vector<1x32x64xbf16>
    %286 = vector.shape_cast %285 : vector<1x32x64xbf16> to vector<32x64xbf16>
    %cst_111 = arith.constant dense<0.000000e+00> : vector<8x64xf32>
    %287 = tpu.matmul %284, %286, %cst_111 {dimension_numbers = #tpu.dot_dimension_numbers<[1], [0], [0], [1], [0, 0, 1, 1], [], []>} : vector<8x32xbf16>, vector<32x64xbf16>, vector<8x64xf32> -> vector<8x64xf32>
    %c1_112 = arith.constant 1 : index
    %c0_113 = arith.constant 0 : index
    %c0_114 = arith.constant 0 : index
    %288 = vector.load %arg6[%c1_112, %c0_113, %c0_114] : memref<2x1x64xf32, #tpu.memory_space<vmem>>, vector<1x1x64xf32>
    %289 = vector.shape_cast %288 : vector<1x1x64xf32> to vector<1x64xf32>
    %290 = vector.broadcast %289 : vector<1x64xf32> to vector<8x64xf32>
    %291 = arith.addf %287, %290 : vector<8x64xf32>
    %cst_115 = arith.constant 0.000000e+00 : f32
    %292 = vector.broadcast %cst_115 : f32 to vector<8x64xf32>
    %293 = arith.maximumf %291, %292 : vector<8x64xf32>
    %294 = arith.truncf %293 : vector<8x64xf32> to vector<8x64xbf16>
    %c1_116 = arith.constant 1 : index
    %c0_117 = arith.constant 0 : index
    %c0_118 = arith.constant 0 : index
    %295 = vector.load %arg7[%c1_116, %c0_117, %c0_118] : memref<2x64x32xbf16, #tpu.memory_space<vmem>>, vector<1x64x32xbf16>
    %296 = vector.shape_cast %295 : vector<1x64x32xbf16> to vector<64x32xbf16>
    %cst_119 = arith.constant dense<0.000000e+00> : vector<8x32xf32>
    %297 = tpu.matmul %294, %296, %cst_119 {dimension_numbers = #tpu.dot_dimension_numbers<[1], [0], [0], [1], [0, 0, 1, 1], [], []>} : vector<8x64xbf16>, vector<64x32xbf16>, vector<8x32xf32> -> vector<8x32xf32>
    %c1_120 = arith.constant 1 : index
    %c0_121 = arith.constant 0 : index
    %c0_122 = arith.constant 0 : index
    %298 = vector.load %arg8[%c1_120, %c0_121, %c0_122] : memref<2x1x32xf32, #tpu.memory_space<vmem>>, vector<1x1x32xf32>
    %299 = vector.shape_cast %298 : vector<1x1x32xf32> to vector<1x32xf32>
    %300 = vector.broadcast %299 : vector<1x32xf32> to vector<8x32xf32>
    %301 = arith.addf %297, %300 : vector<8x32xf32>
    %302 = arith.addf %263, %301 : vector<8x32xf32>
    %c8_123 = arith.constant 8 : index
    %303 = memref.load %arg9[%c8_123] : memref<10xf32, #tpu.memory_space<smem>>
    %c9 = arith.constant 9 : index
    %304 = memref.load %arg9[%c9] : memref<10xf32, #tpu.memory_space<smem>>
    %cst_124 = arith.constant dense<0.000000e+00> : vector<8xf32>
    %305 = vector.multi_reduction <add>, %302, %cst_124 [1] : vector<8x32xf32> to vector<8xf32>
    %306 = vector.shape_cast %305 : vector<8xf32> to vector<8x1xf32>
    %cst_125 = arith.constant 3.200000e+01 : f32
    %307 = vector.broadcast %cst_125 : f32 to vector<8x1xf32>
    %308 = arith.divf %306, %307 : vector<8x1xf32>
    %309 = vector.broadcast %308 : vector<8x1xf32> to vector<8x32xf32>
    %310 = arith.subf %302, %309 : vector<8x32xf32>
    %311 = arith.mulf %310, %310 : vector<8x32xf32>
    %cst_126 = arith.constant dense<0.000000e+00> : vector<8xf32>
    %312 = vector.multi_reduction <add>, %311, %cst_126 [1] : vector<8x32xf32> to vector<8xf32>
    %313 = vector.shape_cast %312 : vector<8xf32> to vector<8x1xf32>
    %cst_127 = arith.constant 0.0322580636 : f32
    %314 = vector.broadcast %cst_127 : f32 to vector<8x1xf32>
    %315 = arith.mulf %313, %314 : vector<8x1xf32>
    %316 = vector.broadcast %303 : f32 to vector<8x32xf32>
    %317 = arith.mulf %316, %310 : vector<8x32xf32>
    %318 = math.sqrt %315 : vector<8x1xf32>
    %cst_128 = arith.constant 9.99999997E-7 : f32
    %319 = vector.broadcast %cst_128 : f32 to vector<8x1xf32>
    %320 = arith.addf %318, %319 : vector<8x1xf32>
    %321 = vector.broadcast %320 : vector<8x1xf32> to vector<8x32xf32>
    %322 = arith.divf %317, %321 : vector<8x32xf32>
    %323 = vector.broadcast %304 : f32 to vector<8x32xf32>
    %324 = arith.addf %322, %323 : vector<8x32xf32>
    %c0_129 = arith.constant 0 : index
    %c0_130 = arith.constant 0 : index
    %c0_131 = arith.constant 0 : index
    %325 = vector.load %arg10[%c0_129, %c0_130, %c0_131] : memref<1x8x32xf32, #tpu.memory_space<vmem>>, vector<1x8x32xf32>
    %326 = vector.shape_cast %325 : vector<1x8x32xf32> to vector<8x32xf32>
    %327 = vector.shape_cast %324 : vector<8x32xf32> to vector<1x8x32xf32>
    tpu.vector_store %arg10[%c0_129, %c0_130, %c0_131], %327 {strides = array<i32>} : memref<1x8x32xf32, #tpu.memory_space<vmem>>, vector<1x8x32xf32>,
    return
  }
  func.func @transform_0(%arg0: i32) -> (i32, i32, i32) {
    %c0_i32 = arith.constant 0 : i32
    %c0_i32_0 = arith.constant 0 : i32
    %c0_i32_1 = arith.constant 0 : i32
    return %arg0, %c0_i32, %c0_i32_0 : i32, i32, i32
  }
  func.func @transform_1(%arg0: i32) -> (i32, i32, i32) {
    %c0_i32 = arith.constant 0 : i32
    %c0_i32_0 = arith.constant 0 : i32
    %c0_i32_1 = arith.constant 0 : i32
    return %arg0, %c0_i32, %c0_i32_0 : i32, i32, i32
  }
  func.func @transform_2(%arg0: i32) -> (i32, i32, i32) {
    %c0_i32 = arith.constant 0 : i32
    %c0_i32_0 = arith.constant 0 : i32
    %c0_i32_1 = arith.constant 0 : i32
    %c0_i32_2 = arith.constant 0 : i32
    return %c0_i32, %c0_i32_0, %c0_i32_1 : i32, i32, i32
  }
  func.func @transform_3(%arg0: i32) -> (i32, i32, i32) {
    %c0_i32 = arith.constant 0 : i32
    %c0_i32_0 = arith.constant 0 : i32
    %c0_i32_1 = arith.constant 0 : i32
    %c0_i32_2 = arith.constant 0 : i32
    return %c0_i32, %c0_i32_0, %c0_i32_1 : i32, i32, i32
  }
  func.func @transform_4(%arg0: i32) -> (i32, i32, i32) {
    %c0_i32 = arith.constant 0 : i32
    %c0_i32_0 = arith.constant 0 : i32
    %c0_i32_1 = arith.constant 0 : i32
    %c0_i32_2 = arith.constant 0 : i32
    return %c0_i32, %c0_i32_0, %c0_i32_1 : i32, i32, i32
  }
  func.func @transform_5(%arg0: i32) -> (i32, i32, i32) {
    %c0_i32 = arith.constant 0 : i32
    %c0_i32_0 = arith.constant 0 : i32
    %c0_i32_1 = arith.constant 0 : i32
    %c0_i32_2 = arith.constant 0 : i32
    return %c0_i32, %c0_i32_0, %c0_i32_1 : i32, i32, i32
  }
  func.func @transform_6(%arg0: i32) -> (i32, i32, i32) {
    %c0_i32 = arith.constant 0 : i32
    %c0_i32_0 = arith.constant 0 : i32
    %c0_i32_1 = arith.constant 0 : i32
    %c0_i32_2 = arith.constant 0 : i32
    return %c0_i32, %c0_i32_0, %c0_i32_1 : i32, i32, i32
  }
  func.func @transform_7(%arg0: i32) -> (i32, i32, i32) {
    %c0_i32 = arith.constant 0 : i32
    %c0_i32_0 = arith.constant 0 : i32
    %c0_i32_1 = arith.constant 0 : i32
    %c0_i32_2 = arith.constant 0 : i32
    return %c0_i32, %c0_i32_0, %c0_i32_1 : i32, i32, i32
  }
  func.func @transform_8(%arg0: i32) -> i32 {
    %c0_i32 = arith.constant 0 : i32
    %c0_i32_0 = arith.constant 0 : i32
    return %c0_i32 : i32
  }
  func.func @transform_9(%arg0: i32) -> (i32, i32, i32) {
    %c0_i32 = arith.constant 0 : i32
    %c0_i32_0 = arith.constant 0 : i32
    %c0_i32_1 = arith.constant 0 : i32
    return %arg0, %c0_i32, %c0_i32_0 : i32, i32, i32
  }
}

</mosaic_0001>

<llo_original>
// kernel: encoder_forward.1
$region0: #{encoder_forward.1}
  #allocation0 [shape = 'u32[]', space=smem, size = 0x4, offset = 0x4, fixed_abs, tag = 'smem constant byte address 0x4 - core index']
  #allocation1 [shape = 'u32[72,128]{1,0:T(1,128)}', space=vmem, size = 0x9000, scoped, tag = 'internal scratch']
  #allocation2 [shape = 'f32[8,32]{1,0:T(8,128)}', space=vmem, size = 0x1000, scoped, tag = 'scratch operand']
  %s0 = inlined_call_operand.hbm [shape: f32[2,8,32], index: 0, kind: input, shape index: {}]
  %s1 = inlined_call_operand.hbm [shape: f32[2,1,8], index: 1, kind: input, shape index: {}]
  %s2 = inlined_call_operand.vmem [shape: bf16[2,32,96], index: 2, kind: input, shape index: {}]
  %s3 = inlined_call_operand.vmem [shape: bf16[2,32,32], index: 3, kind: input, shape index: {}]
  %s4 = inlined_call_operand.vmem [shape: bf16[2,32,64], index: 4, kind: input, shape index: {}]
  %s5 = inlined_call_operand.vmem [shape: f32[2,1,64], index: 5, kind: input, shape index: {}]
  %s6 = inlined_call_operand.vmem [shape: bf16[2,64,32], index: 6, kind: input, shape index: {}]
  %s7 = inlined_call_operand.vmem [shape: f32[2,1,32], index: 7, kind: input, shape index: {}]
  %s8 = inlined_call_operand.vmem [shape: f32[10], index: 8, kind: input, shape index: {}]
  %s9 = inlined_call_operand.hbm [shape: f32[2,8,32], index: 9, kind: output, shape index: {}]
  %s10 = sld [smem:[#allocation0]]
  $region81: #{encoder_forward.1} parent=0
    _
  %s12 = ssub.s32 1, %s10
  %s13 = scalar_select 0, %s12, %s10
  $region1: #{encoder_forward.1} parent=0
    #allocation3 [shape = 'u8[8192]{0}', space=vmem, size = 0x2000, scoped, tag = 'input window, operand 0']
    #allocation4 [shape = 's32[2]{0}', space=sflag, size = 0x8, scoped, tag = 'scoped memory for encoder_forward.1']
    #allocation5 [shape = 's32[2]{0}', space=sflag, size = 0x8, scoped, tag = 'scoped memory for encoder_forward.1']
    #allocation6 [shape = 's32[2]{0}', space=sflag, size = 0x8, scoped, tag = 'scoped memory for encoder_forward.1']
    #allocation7 [shape = 'u8[1024]{0}', space=vmem, size = 0x400, scoped, tag = 'input window, operand 1']
    #allocation8 [shape = 's32[2]{0}', space=sflag, size = 0x8, scoped, tag = 'scoped memory for encoder_forward.1']
    #allocation9 [shape = 'u8[512]{0}', space=smem, size = 0x200, scoped, tag = 'input window, operand 8, single buffered']
    #allocation10 [shape = 'u8[8192]{0}', space=vmem, size = 0x2000, scoped, tag = 'output window, operand 0']
    %14 = vsyncpa [#allocation4], 0
    %s15 = scalar_lea.sflag [#allocation4], 1
    %16 = vsyncpa %s15, 0
    %17 = vsyncpa [#allocation8], 0
    %s18 = scalar_lea.sflag [#allocation8], 1
    %19 = vsyncpa %s18, 0
    %20 = vsyncpa [#allocation6], 0
    %21 = vsyncpa [#allocation5], 0
    %s22 = scalar_lea.sflag [#allocation5], 1
    %23 = vsyncpa %s22, 0
    loop: start=0, step=1, limit=4
    $region2: #{encoder_forward.1} parent=1 // loop_pre_header
      _
    $region3: #{encoder_forward.1} parent=1 // loop_header
      %s25 = sphi 0, %s29
      %p26 = scmp.ge.s32.totalorder %s25, 4
      %s35 = sphi 0, %s37
      %s38 = sphi 0, %s35
      %s39 = sphi 0, %s38
      %s55 = sphi 0, %s39
      %s61 = sphi 0, %s63
      %s64 = sphi 0, %s61
      %s65 = sphi 0, %s64
      %s81 = sphi 0, %s65
      %s85 = sphi 0, %s85
      %s87 = sphi 0, %s85
      %s88 = sphi 0, %s87
      %s102 = sphi 0, %s88
      %s106 = sphi 0, %s106
      %s108 = sphi 0, %s106
      %s109 = sphi 0, %s108
      %s123 = sphi 0, %s109
      %s127 = sphi 0, %s127
      %s129 = sphi 0, %s127
      %s130 = sphi 0, %s129
      %s144 = sphi 0, %s130
      %s148 = sphi 0, %s148
      %s150 = sphi 0, %s148
      %s151 = sphi 0, %s150
      %s165 = sphi 0, %s151
      %s169 = sphi 0, %s169
      %s171 = sphi 0, %s169
      %s172 = sphi 0, %s171
      %s186 = sphi 0, %s172
      %s190 = sphi 0, %s190
      %s192 = sphi 0, %s190
      %s193 = sphi 0, %s192
      %s207 = sphi 0, %s193
      %s211 = sphi 0, %s211
      %s213 = sphi 0, %s211
      %s214 = sphi 0, %s213
      %s228 = sphi 0, %s214
      %s234 = sphi 0, %s236
      %s237 = sphi 0, %s234
      %s238 = sphi 0, %s237
      %s254 = sphi 0, %s238
    $region4: #{encoder_forward.1} parent=1 // loop_header_branch
      %28 = sbr.rel (%p26) target = $region8
    $region5: #{encoder_forward.1} parent=1 // loop_body
      %s30 = ssub.s32 %s25, 1
      %s31 = ssub.s32 %s25, 2
      %s32 = sadd.s32 %s25, 1
      %s33 = ssub.s32 %s25, %s32
      %p34 = scmp.eq.s32.totalorder %s33, 0
      %s36 = sadd.s32 %s35, 1
      %s37 = scalar_select %p34, %s35, %s36
      %p40 = pneg %p34
      %p41 = scmp.eq.s32.totalorder %s25, 1
      %p42 = por %p40, %p41
      %p43 = scmp.ne.s32.totalorder %s35, %s38
      %p44 = scmp.eq.s32.totalorder %s25, 0
      %p45 = por %p43, %p44
      %p46 = scmp.ne.s32.totalorder %s35, %s38
      %p47 = scmp.eq.s32.totalorder %s30, 1
      %p48 = por %p46, %p47
      %p49 = scmp.ne.s32.totalorder %s38, %s39
      %p50 = scmp.eq.s32.totalorder %s30, 0
      %p51 = por %p49, %p50
      %p52 = scmp.ne.s32.totalorder %s38, %s39
      %p53 = scmp.eq.s32.totalorder %s31, 1
      %p54 = por %p52, %p53
      %p56 = scmp.ne.s32.totalorder %s39, %s55
      %p57 = scmp.eq.s32.totalorder %s31, 0
      %p58 = por %p56, %p57
      %s59 = ssub.s32 %s25, %s32
      %p60 = scmp.eq.s32.totalorder %s59, 0
      %s62 = sadd.s32 %s61, 1
      %s63 = scalar_select %p60, %s61, %s62
      %p66 = pneg %p60
      %p67 = scmp.eq.s32.totalorder %s25, 1
      %p68 = por %p66, %p67
      %p69 = scmp.ne.s32.totalorder %s61, %s64
      %p70 = scmp.eq.s32.totalorder %s25, 0
      %p71 = por %p69, %p70
      %p72 = scmp.ne.s32.totalorder %s61, %s64
      %p73 = scmp.eq.s32.totalorder %s30, 1
      %p74 = por %p72, %p73
      %p75 = scmp.ne.s32.totalorder %s64, %s65
      %p76 = scmp.eq.s32.totalorder %s30, 0
      %p77 = por %p75, %p76
      %p78 = scmp.ne.s32.totalorder %s64, %s65
      %p79 = scmp.eq.s32.totalorder %s31, 1
      %p80 = por %p78, %p79
      %p82 = scmp.ne.s32.totalorder %s65, %s81
      %p83 = scmp.eq.s32.totalorder %s31, 0
      %p84 = por %p82, %p83
      %s86 = sadd.s32 %s85, 1
      %p89 = scmp.eq.s32.totalorder %s25, 1
      %p90 = scmp.ne.s32.totalorder %s85, %s87
      %p91 = scmp.eq.s32.totalorder %s25, 0
      %p92 = por %p90, %p91
      %p93 = scmp.ne.s32.totalorder %s85, %s87
      %p94 = scmp.eq.s32.totalorder %s30, 1
      %p95 = por %p93, %p94
      %p96 = scmp.ne.s32.totalorder %s87, %s88
      %p97 = scmp.eq.s32.totalorder %s30, 0
      %p98 = por %p96, %p97
      %p99 = scmp.ne.s32.totalorder %s87, %s88
      %p100 = scmp.eq.s32.totalorder %s31, 1
      %p101 = por %p99, %p100
      %p103 = scmp.ne.s32.totalorder %s88, %s102
      %p104 = scmp.eq.s32.totalorder %s31, 0
      %p105 = por %p103, %p104
      %s107 = sadd.s32 %s106, 1
      %p110 = scmp.eq.s32.totalorder %s25, 1
      %p111 = scmp.ne.s32.totalorder %s106, %s108
      %p112 = scmp.eq.s32.totalorder %s25, 0
      %p113 = por %p111, %p112
      %p114 = scmp.ne.s32.totalorder %s106, %s108
      %p115 = scmp.eq.s32.totalorder %s30, 1
      %p116 = por %p114, %p115
      %p117 = scmp.ne.s32.totalorder %s108, %s109
      %p118 = scmp.eq.s32.totalorder %s30, 0
      %p119 = por %p117, %p118
      %p120 = scmp.ne.s32.totalorder %s108, %s109
      %p121 = scmp.eq.s32.totalorder %s31, 1
      %p122 = por %p120, %p121
      %p124 = scmp.ne.s32.totalorder %s109, %s123
      %p125 = scmp.eq.s32.totalorder %s31, 0
      %p126 = por %p124, %p125
      %s128 = sadd.s32 %s127, 1
      %p131 = scmp.eq.s32.totalorder %s25, 1
      %p132 = scmp.ne.s32.totalorder %s127, %s129
      %p133 = scmp.eq.s32.totalorder %s25, 0
      %p134 = por %p132, %p133
      %p135 = scmp.ne.s32.totalorder %s127, %s129
      %p136 = scmp.eq.s32.totalorder %s30, 1
      %p137 = por %p135, %p136
      %p138 = scmp.ne.s32.totalorder %s129, %s130
      %p139 = scmp.eq.s32.totalorder %s30, 0
      %p140 = por %p138, %p139
      %p141 = scmp.ne.s32.totalorder %s129, %s130
      %p142 = scmp.eq.s32.totalorder %s31, 1
      %p143 = por %p141, %p142
      %p145 = scmp.ne.s32.totalorder %s130, %s144
      %p146 = scmp.eq.s32.totalorder %s31, 0
      %p147 = por %p145, %p146
      %s149 = sadd.s32 %s148, 1
      %p152 = scmp.eq.s32.totalorder %s25, 1
      %p153 = scmp.ne.s32.totalorder %s148, %s150
      %p154 = scmp.eq.s32.totalorder %s25, 0
      %p155 = por %p153, %p154
      %p156 = scmp.ne.s32.totalorder %s148, %s150
      %p157 = scmp.eq.s32.totalorder %s30, 1
      %p158 = por %p156, %p157
      %p159 = scmp.ne.s32.totalorder %s150, %s151
      %p160 = scmp.eq.s32.totalorder %s30, 0
      %p161 = por %p159, %p160
      %p162 = scmp.ne.s32.totalorder %s150, %s151
      %p163 = scmp.eq.s32.totalorder %s31, 1
      %p164 = por %p162, %p163
      %p166 = scmp.ne.s32.totalorder %s151, %s165
      %p167 = scmp.eq.s32.totalorder %s31, 0
      %p168 = por %p166, %p167
      %s170 = sadd.s32 %s169, 1
      %p173 = scmp.eq.s32.totalorder %s25, 1
      %p174 = scmp.ne.s32.totalorder %s169, %s171
      %p175 = scmp.eq.s32.totalorder %s25, 0
      %p176 = por %p174, %p175
      %p177 = scmp.ne.s32.totalorder %s169, %s171
      %p178 = scmp.eq.s32.totalorder %s30, 1
      %p179 = por %p177, %p178
      %p180 = scmp.ne.s32.totalorder %s171, %s172
      %p181 = scmp.eq.s32.totalorder %s30, 0
      %p182 = por %p180, %p181
      %p183 = scmp.ne.s32.totalorder %s171, %s172
      %p184 = scmp.eq.s32.totalorder %s31, 1
      %p185 = por %p183, %p184
      %p187 = scmp.ne.s32.totalorder %s172, %s186
      %p188 = scmp.eq.s32.totalorder %s31, 0
      %p189 = por %p187, %p188
      %s191 = sadd.s32 %s190, 1
      %p194 = scmp.eq.s32.totalorder %s25, 1
      %p195 = scmp.ne.s32.totalorder %s190, %s192
      %p196 = scmp.eq.s32.totalorder %s25, 0
      %p197 = por %p195, %p196
      %p198 = scmp.ne.s32.totalorder %s190, %s192
      %p199 = scmp.eq.s32.totalorder %s30, 1
      %p200 = por %p198, %p199
      %p201 = scmp.ne.s32.totalorder %s192, %s193
      %p202 = scmp.eq.s32.totalorder %s30, 0
      %p203 = por %p201, %p202
      %p204 = scmp.ne.s32.totalorder %s192, %s193
      %p205 = scmp.eq.s32.totalorder %s31, 1
      %p206 = por %p204, %p205
      %p208 = scmp.ne.s32.totalorder %s193, %s207
      %p209 = scmp.eq.s32.totalorder %s31, 0
      %p210 = por %p208, %p209
      %s212 = sadd.s32 %s211, 1
      %p215 = scmp.eq.s32.totalorder %s25, 1
      %p216 = scmp.ne.s32.totalorder %s211, %s213
      %p217 = scmp.eq.s32.totalorder %s25, 0
      %p218 = por %p216, %p217
      %p219 = scmp.ne.s32.totalorder %s211, %s213
      %p220 = scmp.eq.s32.totalorder %s30, 1
      %p221 = por %p219, %p220
      %p222 = scmp.ne.s32.totalorder %s213, %s214
      %p223 = scmp.eq.s32.totalorder %s30, 0
      %p224 = por %p222, %p223
      %p225 = scmp.ne.s32.totalorder %s213, %s214
      %p226 = scmp.eq.s32.totalorder %s31, 1
      %p227 = por %p225, %p226
      %p229 = scmp.ne.s32.totalorder %s214, %s228
      %p230 = scmp.eq.s32.totalorder %s31, 0
      %p231 = por %p229, %p230
      %s232 = ssub.s32 %s25, %s32
      %p233 = scmp.eq.s32.totalorder %s232, 0
      %s235 = sadd.s32 %s234, 1
      %s236 = scalar_select %p233, %s234, %s235
      %p239 = pneg %p233
      %p240 = scmp.eq.s32.totalorder %s25, 1
      %p241 = por %p239, %p240
      %p242 = scmp.ne.s32.totalorder %s234, %s237
      %p243 = scmp.eq.s32.totalorder %s25, 0
      %p244 = por %p242, %p243
      %p245 = scmp.ne.s32.totalorder %s234, %s237
      %p246 = scmp.eq.s32.totalorder %s30, 1
      %p247 = por %p245, %p246
      %p248 = scmp.ne.s32.totalorder %s237, %s238
      %p249 = scmp.eq.s32.totalorder %s30, 0
      %p250 = por %p248, %p249
      %p251 = scmp.ne.s32.totalorder %s237, %s238
      %p252 = scmp.eq.s32.totalorder %s31, 1
      %p253 = por %p251, %p252
      %p255 = scmp.ne.s32.totalorder %s238, %s254
      %p256 = scmp.eq.s32.totalorder %s31, 0
      %p257 = por %p255, %p256
      %p258 = scmp.le.s32.totalorder 1, %s25
      %p259 = scmp.lt.s32.totalorder %s25, 3
      %p260 = pnand %p258, %p259
      %p261 = pneg %p260
      // Predicated region
      $region9: #{encoder_forward.1} parent=5 // pred_check
        _
      $region10: #{encoder_forward.1} parent=5 // pred_check_branch
        %263 = sbr.rel (%p260) target = $region12
      $region11: #{encoder_forward.1} parent=5 // pred_region
        %s264 = ssub.s32 %s25, 1
        // Predicated region
        $region13: #{encoder_forward.1} parent=11 // pred_check
          %p265 = pneg %p98
        $region14: #{encoder_forward.1} parent=11 // pred_check_branch
          %267 = sbr.rel (%p265) target = $region16
        $region15: #{encoder_forward.1} parent=11 // pred_region
          _
        $region16: #{encoder_forward.1} parent=11 // pred_fallthru
          _
        // Predicated region
        $region17: #{encoder_forward.1} parent=11 // pred_check
          %p268 = pneg %p119
        $region18: #{encoder_forward.1} parent=11 // pred_check_branch
          %270 = sbr.rel (%p268) target = $region20
        $region19: #{encoder_forward.1} parent=11 // pred_region
          _
        $region20: #{encoder_forward.1} parent=11 // pred_fallthru
          _
        // Predicated region
        $region21: #{encoder_forward.1} parent=11 // pred_check
          %p271 = pneg %p140
        $region22: #{encoder_forward.1} parent=11 // pred_check_branch
          %273 = sbr.rel (%p271) target = $region24
        $region23: #{encoder_forward.1} parent=11 // pred_region
          _
        $region24: #{encoder_forward.1} parent=11 // pred_fallthru
          _
        // Predicated region
        $region25: #{encoder_forward.1} parent=11 // pred_check
          %p274 = pneg %p161
        $region26: #{encoder_forward.1} parent=11 // pred_check_branch
          %276 = sbr.rel (%p274) target = $region28
        $region27: #{encoder_forward.1} parent=11 // pred_region
          _
        $region28: #{encoder_forward.1} parent=11 // pred_fallthru
          _
        // Predicated region
        $region29: #{encoder_forward.1} parent=11 // pred_check
          %p277 = pneg %p182
        $region30: #{encoder_forward.1} parent=11 // pred_check_branch
          %279 = sbr.rel (%p277) target = $region32
        $region31: #{encoder_forward.1} parent=11 // pred_region
          _
        $region32: #{encoder_forward.1} parent=11 // pred_fallthru
          _
        // Predicated region
        $region33: #{encoder_forward.1} parent=11 // pred_check
          %p280 = pneg %p203
        $region34: #{encoder_forward.1} parent=11 // pred_check_branch
          %282 = sbr.rel (%p280) target = $region36
        $region35: #{encoder_forward.1} parent=11 // pred_region
          _
        $region36: #{encoder_forward.1} parent=11 // pred_fallthru
          _
        // Predicated region
        $region37: #{encoder_forward.1} parent=11 // pred_check
          %p283 = pneg %p224
        $region38: #{encoder_forward.1} parent=11 // pred_check_branch
          %285 = sbr.rel (%p283) target = $region40
        $region39: #{encoder_forward.1} parent=11 // pred_region
          %287 = vsyncadd [#allocation6], 0
          %s289 = sshll.u32 %s8, 4
          %s290 = int_to_ptr.vmem [resolvable:$true] %s289
          %292 = dma.vmem_to_smem %s290, 16, [#allocation9], [#allocation6]
        $region40: #{encoder_forward.1} parent=11 // pred_fallthru
          _
      $region12: #{encoder_forward.1} parent=5 // pred_fallthru
        _
      %p293 = scmp.lt.s32.totalorder %s25, 2
      // Predicated region
      $region41: #{encoder_forward.1} parent=5 // pred_check
        %p294 = pneg %p293
      $region42: #{encoder_forward.1} parent=5 // pred_check_branch
        %296 = sbr.rel (%p294) target = $region44
      $region43: #{encoder_forward.1} parent=5 // pred_region
        // Predicated region
        $region45: #{encoder_forward.1} parent=43 // pred_check
          %p297 = pneg %p45
        $region46: #{encoder_forward.1} parent=43 // pred_check_branch
          %299 = sbr.rel (%p297) target = $region48
        $region47: #{encoder_forward.1} parent=43 // pred_region
          %s300 = sand.u32 %s35, 1
          %s301 = scalar_lea.sflag [#allocation4], %s300
          %s302 = sand.u32 %s35, 1
          %s303 = smul.addr %s302, 8
          %s304 = scalar_lea.vmem [#allocation3], %s303
          %306 = vsyncadd %s301, 0
          %s307 = smul.addr %s25, 8
          %s308 = scalar_lea.hbm %s0, %s307
          %s310 = sshll.u32 %s308, 4
          %s311 = int_to_ptr.hbm [resolvable:$true] %s310
          %s312 = sshll.u32 %s304, 4
          %s313 = int_to_ptr.vmem [resolvable:$true] %s312
          %315 = dma.hbm_to_vmem [thread:$0]  %s311, 128, %s313, %s301
        $region48: #{encoder_forward.1} parent=43 // pred_fallthru
          _
        // Predicated region
        $region49: #{encoder_forward.1} parent=43 // pred_check
          %p316 = pneg %p71
        $region50: #{encoder_forward.1} parent=43 // pred_check_branch
          %318 = sbr.rel (%p316) target = $region52
        $region51: #{encoder_forward.1} parent=43 // pred_region
          %s319 = sand.u32 %s61, 1
          %s320 = scalar_lea.sflag [#allocation8], %s319
          %s321 = sand.u32 %s61, 1
          %s322 = scalar_lea.vmem [#allocation7], %s321
          %324 = vsyncadd %s320, 0
          %s325 = scalar_lea.hbm %s1, %s25
          %s327 = sshll.u32 %s325, 4
          %s328 = int_to_ptr.hbm [resolvable:$true] %s327
          %s329 = sshll.u32 %s322, 4
          %s330 = int_to_ptr.vmem [resolvable:$true] %s329
          %332 = dma.hbm_to_vmem [thread:$0]  %s328, 16, %s330, %s320
        $region52: #{encoder_forward.1} parent=43 // pred_fallthru
          _
      $region44: #{encoder_forward.1} parent=5 // pred_fallthru
        _
      %p333 = scmp.le.s32.totalorder 1, %s25
      %p334 = scmp.lt.s32.totalorder %s25, 3
      %p335 = pnand %p333, %p334
      %p336 = pneg %p335
      // Predicated region
      $region53: #{encoder_forward.1} parent=5 // pred_check
        _
      $region54: #{encoder_forward.1} parent=5 // pred_check_branch
        %338 = sbr.rel (%p335) target = $region56
      $region55: #{encoder_forward.1} parent=5 // pred_region
        %s339 = ssub.s32 %s25, 1
        %s340 = sand.u32 %s38, 1
        %s341 = scalar_lea.sflag [#allocation4], %s340
        %s342 = sand.u32 %s38, 1
        %s343 = smul.addr %s342, 8
        %s344 = scalar_lea.vmem [#allocation3], %s343
        // Predicated region
        $region57: #{encoder_forward.1} parent=55 // pred_check
          %p345 = pneg %p51
        $region58: #{encoder_forward.1} parent=55 // pred_check_branch
          %347 = sbr.rel (%p345) target = $region60
        $region59: #{encoder_forward.1} parent=55 // pred_region
          %349 = dma.done %s341, 128
        $region60: #{encoder_forward.1} parent=55 // pred_fallthru
          _
        %s350 = sand.u32 %s64, 1
        %s351 = scalar_lea.sflag [#allocation8], %s350
        %s352 = sand.u32 %s64, 1
        %s353 = scalar_lea.vmem [#allocation7], %s352
        // Predicated region
        $region61: #{encoder_forward.1} parent=55 // pred_check
          %p354 = pneg %p77
        $region62: #{encoder_forward.1} parent=55 // pred_check_branch
          %356 = sbr.rel (%p354) target = $region64
        $region63: #{encoder_forward.1} parent=55 // pred_region
          %358 = dma.done %s351, 16
        $region64: #{encoder_forward.1} parent=55 // pred_fallthru
          _
        // Predicated region
        $region65: #{encoder_forward.1} parent=55 // pred_check
          %p359 = pneg %p224
        $region66: #{encoder_forward.1} parent=55 // pred_check_branch
          %361 = sbr.rel (%p359) target = $region68
        $region67: #{encoder_forward.1} parent=55 // pred_region
          %363 = dma.done [#allocation6], 16
        $region68: #{encoder_forward.1} parent=55 // pred_fallthru
          _
        %364 = sfence
        %s365 = sand.u32 %s38, 1
        %s366 = scalar_lea.sflag [#allocation4], %s365
        %s367 = sand.u32 %s38, 1
        %s368 = smul.addr %s367, 8
        %s369 = scalar_lea.vmem [#allocation3], %s368
        %p370 = pneg %p51
        %p371 = pneg %p48
        %s372 = sand.u32 %s64, 1
        %s373 = scalar_lea.sflag [#allocation8], %s372
        %s374 = sand.u32 %s64, 1
        %s375 = scalar_lea.vmem [#allocation7], %s374
        %p376 = pneg %p77
        %p377 = pneg %p74
        %p378 = pneg %p98
        %p379 = pneg %p95
        %p380 = pneg %p119
        %p381 = pneg %p116
        %p382 = pneg %p140
        %p383 = pneg %p137
        %p384 = pneg %p161
        %p385 = pneg %p158
        %p386 = pneg %p182
        %p387 = pneg %p179
        %p388 = pneg %p203
        %p389 = pneg %p200
        %p390 = pneg %p224
        %p391 = pneg %p221
        %p392 = pneg %p250
        %p393 = pneg %p247
        %s394 = sand.u32 %s237, 1
        %s395 = scalar_lea.sflag [#allocation5], %s394
        %s396 = sand.u32 %s237, 1
        %s397 = smul.addr %s396, 8
        %s398 = scalar_lea.vmem [#allocation10], %s397
        %v400 = vld [vmem:[%s344] sm:$0xff]
        %v401 = vld [vmem:[%s353] sm:$0x1]
        %vm402 = vcmp.eq.f32.partialorder %v401, 0.0
        %v403 = vsel %vm402, -1e+09, 0.0
        %v405 = vperm.slane %v403, 0
        %s407 = sld [smem:[#allocation9]]
        %s408 = sld [smem:[#allocation9 + $0x1]]
        %s409 = sld [smem:[#allocation9 + $0x2]]
        %s410 = sld [smem:[#allocation9 + $0x3]]
        %v411 = vld [vmem:[%s2] sm:$0xf]
        %v412 = vld [vmem:[%s2 + $0x4] sm:$0xf]
        %v413 = vld [vmem:[%s2 + $0x8] sm:$0xf]
        %v414 = vld [vmem:[%s2 + $0xc] sm:$0xf]
        %v415 = vld [vmem:[%s3] sm:$0xf]
        %v416 = vld [vmem:[%s3 + $0x4] sm:$0xf]
        %v417 = vld [vmem:[%s3 + $0x8] sm:$0xf]
        %v418 = vld [vmem:[%s3 + $0xc] sm:$0xf]
        %vm419 = vcmask 261120
        %v420 = vsel %vm419, %v400, 0.0
        %421 = vadd.xlane.f32.xlu0 %v420
        %v422 = vpop.xlane.xlu0 %421
        %v423 = vrcp.pop 32.0
        %v424 = vmul.f32 32.0, %v423
        %v425 = vsub.f32 1.0, %v424
        %v426 = vmul.f32 %v423, %v425
        %v427 = vadd.f32 %v423, %v426
        %vm428 = vweird.f32 %v423
        %v429 = vsel %vm428, %v423, %v427
        %v430 = vmul.f32 %v422, %v429
        %v431 = vsub.f32 %v400, %v430
        %v432 = vmul.f32 %v431, %v431
        %v433 = vsel %vm419, %v432, 0.0
        %434 = vadd.xlane.f32.xlu0 %v433
        %v435 = vpop.xlane.xlu0 %434
        %v436 = vmul.f32 %v435, 0.032258064
        %v437 = vstv %s407
        %v438 = vmul.f32 %v437, %v431
        %v439 = vrsqrt.pop %v436
        %v440 = vmul.f32 %v439, %v436
        %v441 = vmul.f32 %v440, %v439
        %v442 = vmul.f32 0.5, %v441
        %v443 = vsub.f32 1.5, %v442
        %v444 = vmul.f32 %v439, %v443
        %v445 = vmul.f32 %v436, %v444
        %vm446 = vcmp.eq.f32.partialorder %v436, inf
        %v447 = vsel %vm446, %v436, %v445
        %vm448 = vcmp.eq.f32.partialorder %v436, 0.0
        %v449 = vand.u32 %v436, 2147483648
        %v450 = vsel %vm448, %v449, %v447
        %v451 = vadd.f32 %v450, 1e-06
        %v452 = vrcp.pop %v451
        %v453 = vmul.f32 %v451, %v452
        %v454 = vsub.f32 1.0, %v453
        %v455 = vmul.f32 %v452, %v454
        %v456 = vadd.f32 %v452, %v455
        %vm457 = vweird.f32 %v451
        %vm458 = vweird.f32 %v452
        %vm459 = vmor %vm457, %vm458
        %v460 = vsel %vm459, %v452, %v456
        %v461 = vand.u32 2147483647, %v451
        %vm462 = vcmp.eq.f32.partialorder %v461, 8.507059e+37
        %v463 = vand.u32 %v451, 2147483648
        %v464 = vor.u32 1.1754944e-38, %v463
        %v465 = vsel %vm462, %v464, %v460
        %v466 = vmul.f32 %v438, %v465
        %v467 = vstv %s408
        %v468 = vadd.f32 %v466, %v467
        %v469 = vpack.c.bf16 %v468, %v468
        %v474 = vunpack.c.l.b16 %v411
        %v475 = vunpack.c.l.b16 %v412
        %v476 = vunpack.c.l.b16 %v413
        %v477 = vunpack.c.l.b16 %v414
        %v478 = vpack.c.b16 %v475, %v474
        %v479 = vpack.c.b16 %v477, %v476
        %v483 = vsel %vm419, %v469, 0
        %485 = vmatpush.bf16.msra.mxu0 0
        %486 = vmatpush.bf16.msra.mxu0 0
        %487 = vmatpush.bf16.msra.mxu0 0
        %488 = vmatpush.bf16.msra.mxu0 0
        %489 = vmatpush.bf16.msra.mxu0 0
        %490 = vmatpush.bf16.msra.mxu0 0
        %491 = vmatpush.bf16.msra.mxu0 %v479
        %492 = vmatpush.bf16.msra.mxu0 %v478
        %493 = vmatmul.bf16.gmra.mxu0 %v483
        %v494 = vpop.f32.mrf.mxu0
        %v495 = vadd.f32 0.0, %v494
        %v496 = vpop.f32.mrf.mxu0
        %497 = vdwg.mxu0
        %v498 = vpack.c.bf16 %v495, %v495
        %v500 = vunpack.c.l.b16 %v498
        %v501 = vpack.c.b16 %v500, %v500
        %502 = vrot.lane.b32.xlu0 %v501, 96
        %v503 = vpop.permute.xlu0 %502
        %vm504 = vcmask 64512
        %v506 = vsel %vm504, %v498, 0
        %v509 = vsel %vm504, %v503, 0
        %511 = vmatpush.bf16.xpose.msra.mxu0 0
        %512 = vmatpush.bf16.xpose.msra.mxu0 0
        %513 = vmatpush.bf16.xpose.msra.mxu0 0
        %514 = vmatpush.bf16.xpose.msra.mxu0 0
        %515 = vmatpush.bf16.xpose.msra.mxu0 0
        %516 = vmatpush.bf16.xpose.msra.mxu0 0
        %517 = vmatpush.bf16.xpose.msra.mxu0 0
        %518 = vmatpush.bf16.xpose.msra.mxu0 %v509
        %519 = vmatmul.bf16.gmra.mxu0 %v506
        %v520 = vpop.f32.mrf.mxu0
        %v521 = vadd.f32 %v405, %v520
        %v522 = vpop.f32.mrf.mxu0
        %523 = vdwg.mxu0
        %v524 = vsel %vm504, %v521, -inf
        %525 = vmax.xlane.f32.xlu0 %v524
        %v526 = vpop.xlane.xlu0 %525
        %v527 = vsub.f32 %v521, %v526
        %v528 = vmul.f32 %v527, 1.442695
        %v529 = vpow.pop %v528
        %v530 = vsel %vm504, %v529, 0.0
        %531 = vadd.xlane.f32.xlu0 %v530
        %v532 = vpop.xlane.xlu0 %531
        %v533 = vrcp.pop %v532
        %v534 = vmul.f32 %v529, %v533
        %v535 = vpack.c.bf16 %v534, %v534
        %536 = vrot.lane.b32.xlu0 %v501, 64
        %v537 = vpop.permute.xlu0 %536
        %v539 = vsel %vm504, %v535, 0
        %vm541 = vcmask 1043456
        %v543 = vsel %vm541, %v537, 0
        %545 = vmatpush.bf16.msra.mxu0 0
        %546 = vmatpush.bf16.msra.mxu0 0
        %547 = vmatpush.bf16.msra.mxu0 0
        %548 = vmatpush.bf16.msra.mxu0 0
        %549 = vmatpush.bf16.msra.mxu0 0
        %550 = vmatpush.bf16.msra.mxu0 0
        %551 = vmatpush.bf16.msra.mxu0 0
        %552 = vmatpush.bf16.msra.mxu0 %v543
        %553 = vmatmul.bf16.gmra.mxu0 %v539
        %v554 = vpop.f32.mrf.mxu0
        %v555 = vadd.f32 0.0, %v554
        %v556 = vpop.f32.mrf.mxu0
        %557 = vdwg.mxu0
        %558 = vst.msk [vmem:[#allocation2] sm:$0xff] %vm504, %v555
        %559 = vrot.lane.b32.xlu0 %v501, 120
        %v560 = vpop.permute.xlu0 %559
        %561 = vrot.lane.b32.xlu0 %v501, 88
        %v562 = vpop.permute.xlu0 %561
        %v564 = vsel %vm504, %v560, 0
        %v567 = vsel %vm504, %v562, 0
        %569 = vmatpush.bf16.xpose.msra.mxu0 0
        %570 = vmatpush.bf16.xpose.msra.mxu0 0
        %571 = vmatpush.bf16.xpose.msra.mxu0 0
        %572 = vmatpush.bf16.xpose.msra.mxu0 0
        %573 = vmatpush.bf16.xpose.msra.mxu0 0
        %574 = vmatpush.bf16.xpose.msra.mxu0 0
        %575 = vmatpush.bf16.xpose.msra.mxu0 0
        %576 = vmatpush.bf16.xpose.msra.mxu0 %v567
        %577 = vmatmul.bf16.gmra.mxu0 %v564
        %v578 = vpop.f32.mrf.mxu0
        %v579 = vadd.f32 %v405, %v578
        %v580 = vpop.f32.mrf.mxu0
        %581 = vdwg.mxu0
        %v582 = vsel %vm504, %v579, -inf
        %583 = vmax.xlane.f32.xlu0 %v582
        %v584 = vpop.xlane.xlu0 %583
        %v585 = vsub.f32 %v579, %v584
        %v586 = vmul.f32 %v585, 1.442695
        %v587 = vpow.pop %v586
        %v588 = vsel %vm504, %v587, 0.0
        %589 = vadd.xlane.f32.xlu0 %v588
        %v590 = vpop.xlane.xlu0 %589
        %v591 = vrcp.pop %v590
        %v592 = vmul.f32 %v587, %v591
        %v593 = vpack.c.bf16 %v592, %v592
        %594 = vrot.lane.b32.xlu0 %v501, 56
        %v595 = vpop.permute.xlu0 %594
        %v597 = vsel %vm504, %v593, 0
        %v600 = vsel %vm541, %v595, 0
        %602 = vmatpush.bf16.msra.mxu0 0
        %603 = vmatpush.bf16.msra.mxu0 0
        %604 = vmatpush.bf16.msra.mxu0 0
        %605 = vmatpush.bf16.msra.mxu0 0
        %606 = vmatpush.bf16.msra.mxu0 0
        %607 = vmatpush.bf16.msra.mxu0 0
        %608 = vmatpush.bf16.msra.mxu0 0
        %609 = vmatpush.bf16.msra.mxu0 %v600
        %610 = vmatmul.bf16.gmra.mxu0 %v597
        %v611 = vpop.f32.mrf.mxu0
        %v612 = vadd.f32 0.0, %v611
        %v613 = vpop.f32.mrf.mxu0
        %614 = vdwg.mxu0
        %616 = vrot.lane.b32.xlu0 %v612, 8
        %v617 = vpop.permute.xlu0 %616
        %vm619 = vcmask 130112
        %620 = vst.msk [vmem:[#allocation2] sm:$0xff] %vm619, %v617
        %621 = vrot.lane.b32.xlu0 %v501, 112
        %v622 = vpop.permute.xlu0 %621
        %623 = vrot.lane.b32.xlu0 %v501, 80
        %v624 = vpop.permute.xlu0 %623
        %v626 = vsel %vm504, %v622, 0
        %v629 = vsel %vm504, %v624, 0
        %631 = vmatpush.bf16.xpose.msra.mxu0 0
        %632 = vmatpush.bf16.xpose.msra.mxu0 0
        %633 = vmatpush.bf16.xpose.msra.mxu0 0
        %634 = vmatpush.bf16.xpose.msra.mxu0 0
        %635 = vmatpush.bf16.xpose.msra.mxu0 0
        %636 = vmatpush.bf16.xpose.msra.mxu0 0
        %637 = vmatpush.bf16.xpose.msra.mxu0 0
        %638 = vmatpush.bf16.xpose.msra.mxu0 %v629
        %639 = vmatmul.bf16.gmra.mxu0 %v626
        %v640 = vpop.f32.mrf.mxu0
        %v641 = vadd.f32 %v405, %v640
        %v642 = vpop.f32.mrf.mxu0
        %643 = vdwg.mxu0
        %v644 = vsel %vm504, %v641, -inf
        %645 = vmax.xlane.f32.xlu0 %v644
        %v646 = vpop.xlane.xlu0 %645
        %v647 = vsub.f32 %v641, %v646
        %v648 = vmul.f32 %v647, 1.442695
        %v649 = vpow.pop %v648
        %v650 = vsel %vm504, %v649, 0.0
        %651 = vadd.xlane.f32.xlu0 %v650
        %v652 = vpop.xlane.xlu0 %651
        %v653 = vrcp.pop %v652
        %v654 = vmul.f32 %v649, %v653
        %v655 = vpack.c.bf16 %v654, %v654
        %656 = vrot.lane.b32.xlu0 %v501, 48
        %v657 = vpop.permute.xlu0 %656
        %v659 = vsel %vm504, %v655, 0
        %v662 = vsel %vm541, %v657, 0
        %664 = vmatpush.bf16.msra.mxu0 0
        %665 = vmatpush.bf16.msra.mxu0 0
        %666 = vmatpush.bf16.msra.mxu0 0
        %667 = vmatpush.bf16.msra.mxu0 0
        %668 = vmatpush.bf16.msra.mxu0 0
        %669 = vmatpush.bf16.msra.mxu0 0
        %670 = vmatpush.bf16.msra.mxu0 0
        %671 = vmatpush.bf16.msra.mxu0 %v662
        %672 = vmatmul.bf16.gmra.mxu0 %v659
        %v673 = vpop.f32.mrf.mxu0
        %v674 = vadd.f32 0.0, %v673
        %v675 = vpop.f32.mrf.mxu0
        %676 = vdwg.mxu0
        %678 = vrot.lane.b32.xlu0 %v674, 16
        %v679 = vpop.permute.xlu0 %678
        %vm681 = vcmask 195712
        %682 = vst.msk [vmem:[#allocation2] sm:$0xff] %vm681, %v679
        %683 = vrot.lane.b32.xlu0 %v501, 104
        %v684 = vpop.permute.xlu0 %683
        %685 = vrot.lane.b32.xlu0 %v501, 72
        %v686 = vpop.permute.xlu0 %685
        %v688 = vsel %vm504, %v684, 0
        %v691 = vsel %vm504, %v686, 0
        %693 = vmatpush.bf16.xpose.msra.mxu0 0
        %694 = vmatpush.bf16.xpose.msra.mxu0 0
        %695 = vmatpush.bf16.xpose.msra.mxu0 0
        %696 = vmatpush.bf16.xpose.msra.mxu0 0
        %697 = vmatpush.bf16.xpose.msra.mxu0 0
        %698 = vmatpush.bf16.xpose.msra.mxu0 0
        %699 = vmatpush.bf16.xpose.msra.mxu0 0
        %700 = vmatpush.bf16.xpose.msra.mxu0 %v691
        %701 = vmatmul.bf16.gmra.mxu0 %v688
        %v702 = vpop.f32.mrf.mxu0
        %v703 = vadd.f32 %v405, %v702
        %v704 = vpop.f32.mrf.mxu0
        %705 = vdwg.mxu0
        %v706 = vsel %vm504, %v703, -inf
        %707 = vmax.xlane.f32.xlu0 %v706
        %v708 = vpop.xlane.xlu0 %707
        %v709 = vsub.f32 %v703, %v708
        %v710 = vmul.f32 %v709, 1.442695
        %v711 = vpow.pop %v710
        %v712 = vsel %vm504, %v711, 0.0
        %713 = vadd.xlane.f32.xlu0 %v712
        %v714 = vpop.xlane.xlu0 %713
        %v715 = vrcp.pop %v714
        %v716 = vmul.f32 %v711, %v715
        %v717 = vpack.c.bf16 %v716, %v716
        %718 = vrot.lane.b32.xlu0 %v501, 40
        %v719 = vpop.permute.xlu0 %718
        %v721 = vsel %vm504, %v717, 0
        %v724 = vsel %vm541, %v719, 0
        %726 = vmatpush.bf16.msra.mxu0 0
        %727 = vmatpush.bf16.msra.mxu0 0
        %728 = vmatpush.bf16.msra.mxu0 0
        %729 = vmatpush.bf16.msra.mxu0 0
        %730 = vmatpush.bf16.msra.mxu0 0
        %731 = vmatpush.bf16.msra.mxu0 0
        %732 = vmatpush.bf16.msra.mxu0 0
        %733 = vmatpush.bf16.msra.mxu0 %v724
        %734 = vmatmul.bf16.gmra.mxu0 %v721
        %v735 = vpop.f32.mrf.mxu0
        %v736 = vadd.f32 0.0, %v735
        %v737 = vpop.f32.mrf.mxu0
        %738 = vdwg.mxu0
        %740 = vrot.lane.b32.xlu0 %v736, 24
        %v741 = vpop.permute.xlu0 %740
        %vm743 = vcmask 261312
        %744 = vst.msk [vmem:[#allocation2] sm:$0xff] %vm743, %v741
        %v745 = vld [vmem:[#allocation2] sm:$0xff]
        %v746 = vpack.c.bf16 %v745, %v745
        %v751 = vunpack.c.l.b16 %v415
        %v752 = vunpack.c.l.b16 %v416
        %v753 = vunpack.c.l.b16 %v417
        %v754 = vunpack.c.l.b16 %v418
        %v755 = vpack.c.b16 %v752, %v751
        %v756 = vpack.c.b16 %v754, %v753
        %v760 = vsel %vm419, %v746, 0
        %762 = vmatpush.bf16.msra.mxu0 0
        %763 = vmatpush.bf16.msra.mxu0 0
        %764 = vmatpush.bf16.msra.mxu0 0
        %765 = vmatpush.bf16.msra.mxu0 0
        %766 = vmatpush.bf16.msra.mxu0 0
        %767 = vmatpush.bf16.msra.mxu0 0
        %768 = vmatpush.bf16.msra.mxu0 %v756
        %769 = vmatpush.bf16.msra.mxu0 %v755
        %770 = vmatmul.bf16.gmra.mxu0 %v760
        %v771 = vpop.f32.mrf.mxu0
        %v772 = vadd.f32 0.0, %v771
        %v773 = vpop.f32.mrf.mxu0
        %774 = vdwg.mxu0
        %v775 = vadd.f32 %v400, %v772
        %v776 = vsel %vm419, %v775, 0.0
        %777 = vadd.xlane.f32.xlu0 %v776
        %v778 = vpop.xlane.xlu0 %777
        %v779 = vmul.f32 %v778, %v429
        %v780 = vsub.f32 %v775, %v779
        %v781 = vmul.f32 %v780, %v780
        %v782 = vsel %vm419, %v781, 0.0
        %783 = vadd.xlane.f32.xlu0 %v782
        %v784 = vpop.xlane.xlu0 %783
        %v785 = vmul.f32 %v784, 0.032258064
        %v786 = vstv %s409
        %v787 = vmul.f32 %v786, %v780
        %v788 = vrsqrt.pop %v785
        %v789 = vmul.f32 %v788, %v785
        %v790 = vmul.f32 %v789, %v788
        %v791 = vmul.f32 0.5, %v790
        %v792 = vsub.f32 1.5, %v791
        %v793 = vmul.f32 %v788, %v792
        %v794 = vmul.f32 %v785, %v793
        %vm795 = vcmp.eq.f32.partialorder %v785, inf
        %v796 = vsel %vm795, %v785, %v794
        %vm797 = vcmp.eq.f32.partialorder %v785, 0.0
        %v798 = vand.u32 %v785, 2147483648
        %v799 = vsel %vm797, %v798, %v796
        %v800 = vadd.f32 %v799, 1e-06
        %v801 = vrcp.pop %v800
        %v802 = vmul.f32 %v800, %v801
        %v803 = vsub.f32 1.0, %v802
        %v804 = vmul.f32 %v801, %v803
        %v805 = vadd.f32 %v801, %v804
        %vm806 = vweird.f32 %v800
        %vm807 = vweird.f32 %v801
        %vm808 = vmor %vm806, %vm807
        %v809 = vsel %vm808, %v801, %v805
        %v810 = vand.u32 2147483647, %v800
        %vm811 = vcmp.eq.f32.partialorder %v810, 8.507059e+37
        %v812 = vand.u32 %v800, 2147483648
        %v813 = vor.u32 1.1754944e-38, %v812
        %v814 = vsel %vm811, %v813, %v809
        %v815 = vmul.f32 %v787, %v814
        %v816 = vstv %s410
        %v817 = vadd.f32 %v815, %v816
        %v818 = vpack.c.bf16 %v817, %v817
        %v819 = vld [vmem:[%s4] sm:$0xf]
        %v820 = vld [vmem:[%s4 + $0x4] sm:$0xf]
        %v821 = vld [vmem:[%s4 + $0x8] sm:$0xf]
        %v822 = vld [vmem:[%s4 + $0xc] sm:$0xf]
        %v823 = vld [vmem:[%s5] sm:$0x1]
        %v825 = vperm.slane %v823, 0
        %v831 = vunpack.c.l.b16 %v819
        %v832 = vunpack.c.l.b16 %v820
        %v833 = vunpack.c.l.b16 %v821
        %v834 = vunpack.c.l.b16 %v822
        %v835 = vpack.c.b16 %v832, %v831
        %v836 = vpack.c.b16 %v834, %v833
        %v840 = vsel %vm419, %v818, 0
        %842 = vmatpush.bf16.msra.mxu0 0
        %843 = vmatpush.bf16.msra.mxu0 0
        %844 = vmatpush.bf16.msra.mxu0 0
        %845 = vmatpush.bf16.msra.mxu0 0
        %846 = vmatpush.bf16.msra.mxu0 0
        %847 = vmatpush.bf16.msra.mxu0 0
        %848 = vmatpush.bf16.msra.mxu0 %v836
        %849 = vmatpush.bf16.msra.mxu0 %v835
        %850 = vmatmul.bf16.gmra.mxu0 %v840
        %v851 = vpop.f32.mrf.mxu0
        %v852 = vadd.f32 %v825, %v851
        %v853 = vpop.f32.mrf.mxu0
        %854 = vdwg.mxu0
        %v855 = vmax.f32 %v852, 0.0
        %v856 = vpack.c.bf16 %v855, %v855
        %v857 = vld [vmem:[%s6] sm:$0xf]
        %v858 = vld [vmem:[%s6 + $0x4] sm:$0xf]
        %v859 = vld [vmem:[%s6 + $0x8] sm:$0xf]
        %v860 = vld [vmem:[%s6 + $0xc] sm:$0xf]
        %v861 = vld [vmem:[%s6 + $0x10] sm:$0xf]
        %v862 = vld [vmem:[%s6 + $0x14] sm:$0xf]
        %v863 = vld [vmem:[%s6 + $0x18] sm:$0xf]
        %v864 = vld [vmem:[%s6 + $0x1c] sm:$0xf]
        %v865 = vld [vmem:[%s7] sm:$0x1]
        %v867 = vperm.slane %v865, 0
        %v877 = vunpack.c.l.b16 %v857
        %v878 = vunpack.c.l.b16 %v858
        %v879 = vunpack.c.l.b16 %v859
        %v880 = vunpack.c.l.b16 %v860
        %v881 = vunpack.c.l.b16 %v861
        %v882 = vunpack.c.l.b16 %v862
        %v883 = vunpack.c.l.b16 %v863
        %v884 = vunpack.c.l.b16 %v864
        %v885 = vpack.c.b16 %v878, %v877
        %v886 = vpack.c.b16 %v880, %v879
        %v887 = vpack.c.b16 %v882, %v881
        %v888 = vpack.c.b16 %v884, %v883
        %vm893 = vcmask 523264
        %v895 = vsel %vm893, %v856, 0
        %897 = vmatpush.bf16.msra.mxu0 0
        %898 = vmatpush.bf16.msra.mxu0 0
        %899 = vmatpush.bf16.msra.mxu0 0
        %900 = vmatpush.bf16.msra.mxu0 0
        %901 = vmatpush.bf16.msra.mxu0 %v888
        %902 = vmatpush.bf16.msra.mxu0 %v887
        %903 = vmatpush.bf16.msra.mxu0 %v886
        %904 = vmatpush.bf16.msra.mxu0 %v885
        %905 = vmatmul.bf16.gmra.mxu0 %v895
        %v906 = vpop.f32.mrf.mxu0
        %v907 = vadd.f32 %v867, %v906
        %v908 = vpop.f32.mrf.mxu0
        %909 = vdwg.mxu0
        %v910 = vadd.f32 %v775, %v907
        %s911 = sld [smem:[#allocation9 + $0x4]]
        %s912 = sld [smem:[#allocation9 + $0x5]]
        %s913 = sld [smem:[#allocation9 + $0x6]]
        %s914 = sld [smem:[#allocation9 + $0x7]]
        %s915 = scalar_lea.vmem %s2, 16
        %v916 = vld [vmem:[%s915] sm:$0xf]
        %v917 = vld [vmem:[%s915 + $0x4] sm:$0xf]
        %v918 = vld [vmem:[%s915 + $0x8] sm:$0xf]
        %v919 = vld [vmem:[%s915 + $0xc] sm:$0xf]
        %s920 = scalar_lea.vmem %s3, 16
        %v921 = vld [vmem:[%s920] sm:$0xf]
        %v922 = vld [vmem:[%s920 + $0x4] sm:$0xf]
        %v923 = vld [vmem:[%s920 + $0x8] sm:$0xf]
        %v924 = vld [vmem:[%s920 + $0xc] sm:$0xf]
        %v925 = vsel %vm419, %v910, 0.0
        %926 = vadd.xlane.f32.xlu0 %v925
        %v927 = vpop.xlane.xlu0 %926
        %v928 = vmul.f32 %v927, %v429
        %v929 = vsub.f32 %v910, %v928
        %v930 = vmul.f32 %v929, %v929
        %v931 = vsel %vm419, %v930, 0.0
        %932 = vadd.xlane.f32.xlu0 %v931
        %v933 = vpop.xlane.xlu0 %932
        %v934 = vmul.f32 %v933, 0.032258064
        %v935 = vstv %s911
        %v936 = vmul.f32 %v935, %v929
        %v937 = vrsqrt.pop %v934
        %v938 = vmul.f32 %v937, %v934
        %v939 = vmul.f32 %v938, %v937
        %v940 = vmul.f32 0.5, %v939
        %v941 = vsub.f32 1.5, %v940
        %v942 = vmul.f32 %v937, %v941
        %v943 = vmul.f32 %v934, %v942
        %vm944 = vcmp.eq.f32.partialorder %v934, inf
        %v945 = vsel %vm944, %v934, %v943
        %vm946 = vcmp.eq.f32.partialorder %v934, 0.0
        %v947 = vand.u32 %v934, 2147483648
        %v948 = vsel %vm946, %v947, %v945
        %v949 = vadd.f32 %v948, 1e-06
        %v950 = vrcp.pop %v949
        %v951 = vmul.f32 %v949, %v950
        %v952 = vsub.f32 1.0, %v951
        %v953 = vmul.f32 %v950, %v952
        %v954 = vadd.f32 %v950, %v953
        %vm955 = vweird.f32 %v949
        %vm956 = vweird.f32 %v950
        %vm957 = vmor %vm955, %vm956
        %v958 = vsel %vm957, %v950, %v954
        %v959 = vand.u32 2147483647, %v949
        %vm960 = vcmp.eq.f32.partialorder %v959, 8.507059e+37
        %v961 = vand.u32 %v949, 2147483648
        %v962 = vor.u32 1.1754944e-38, %v961
        %v963 = vsel %vm960, %v962, %v958
        %v964 = vmul.f32 %v936, %v963
        %v965 = vstv %s912
        %v966 = vadd.f32 %v964, %v965
        %v967 = vpack.c.bf16 %v966, %v966
        %v972 = vunpack.c.l.b16 %v916
        %v973 = vunpack.c.l.b16 %v917
        %v974 = vunpack.c.l.b16 %v918
        %v975 = vunpack.c.l.b16 %v919
        %v976 = vpack.c.b16 %v973, %v972
        %v977 = vpack.c.b16 %v975, %v974
        %v981 = vsel %vm419, %v967, 0
        %983 = vmatpush.bf16.msra.mxu0 0
        %984 = vmatpush.bf16.msra.mxu0 0
        %985 = vmatpush.bf16.msra.mxu0 0
        %986 = vmatpush.bf16.msra.mxu0 0
        %987 = vmatpush.bf16.msra.mxu0 0
        %988 = vmatpush.bf16.msra.mxu0 0
        %989 = vmatpush.bf16.msra.mxu0 %v977
        %990 = vmatpush.bf16.msra.mxu0 %v976
        %991 = vmatmul.bf16.gmra.mxu0 %v981
        %v992 = vpop.f32.mrf.mxu0
        %v993 = vadd.f32 0.0, %v992
        %v994 = vpop.f32.mrf.mxu0
        %995 = vdwg.mxu0
        %v996 = vpack.c.bf16 %v993, %v993
        %v998 = vunpack.c.l.b16 %v996
        %v999 = vpack.c.b16 %v998, %v998
        %1000 = vrot.lane.b32.xlu0 %v999, 96
        %v1001 = vpop.permute.xlu0 %1000
        %v1003 = vsel %vm504, %v996, 0
        %v1006 = vsel %vm504, %v1001, 0
        %1008 = vmatpush.bf16.xpose.msra.mxu0 0
        %1009 = vmatpush.bf16.xpose.msra.mxu0 0
        %1010 = vmatpush.bf16.xpose.msra.mxu0 0
        %1011 = vmatpush.bf16.xpose.msra.mxu0 0
        %1012 = vmatpush.bf16.xpose.msra.mxu0 0
        %1013 = vmatpush.bf16.xpose.msra.mxu0 0
        %1014 = vmatpush.bf16.xpose.msra.mxu0 0
        %1015 = vmatpush.bf16.xpose.msra.mxu0 %v1006
        %1016 = vmatmul.bf16.gmra.mxu0 %v1003
        %v1017 = vpop.f32.mrf.mxu0
        %v1018 = vadd.f32 %v405, %v1017
        %v1019 = vpop.f32.mrf.mxu0
        %1020 = vdwg.mxu0
        %v1021 = vsel %vm504, %v1018, -inf
        %1022 = vmax.xlane.f32.xlu0 %v1021
        %v1023 = vpop.xlane.xlu0 %1022
        %v1024 = vsub.f32 %v1018, %v1023
        %v1025 = vmul.f32 %v1024, 1.442695
        %v1026 = vpow.pop %v1025
        %v1027 = vsel %vm504, %v1026, 0.0
        %1028 = vadd.xlane.f32.xlu0 %v1027
        %v1029 = vpop.xlane.xlu0 %1028
        %v1030 = vrcp.pop %v1029
        %v1031 = vmul.f32 %v1026, %v1030
        %v1032 = vpack.c.bf16 %v1031, %v1031
        %1033 = vrot.lane.b32.xlu0 %v999, 64
        %v1034 = vpop.permute.xlu0 %1033
        %v1036 = vsel %vm504, %v1032, 0
        %v1039 = vsel %vm541, %v1034, 0
        %1041 = vmatpush.bf16.msra.mxu0 0
        %1042 = vmatpush.bf16.msra.mxu0 0
        %1043 = vmatpush.bf16.msra.mxu0 0
        %1044 = vmatpush.bf16.msra.mxu0 0
        %1045 = vmatpush.bf16.msra.mxu0 0
        %1046 = vmatpush.bf16.msra.mxu0 0
        %1047 = vmatpush.bf16.msra.mxu0 0
        %1048 = vmatpush.bf16.msra.mxu0 %v1039
        %1049 = vmatmul.bf16.gmra.mxu0 %v1036
        %v1050 = vpop.f32.mrf.mxu0
        %v1051 = vadd.f32 0.0, %v1050
        %v1052 = vpop.f32.mrf.mxu0
        %1053 = vdwg.mxu0
        %1054 = vst.msk [vmem:[#allocation2] sm:$0xff] %vm504, %v1051
        %1055 = vrot.lane.b32.xlu0 %v999, 120
        %v1056 = vpop.permute.xlu0 %1055
        %1057 = vrot.lane.b32.xlu0 %v999, 88
        %v1058 = vpop.permute.xlu0 %1057
        %v1060 = vsel %vm504, %v1056, 0
        %v1063 = vsel %vm504, %v1058, 0
        %1065 = vmatpush.bf16.xpose.msra.mxu0 0
        %1066 = vmatpush.bf16.xpose.msra.mxu0 0
        %1067 = vmatpush.bf16.xpose.msra.mxu0 0
        %1068 = vmatpush.bf16.xpose.msra.mxu0 0
        %1069 = vmatpush.bf16.xpose.msra.mxu0 0
        %1070 = vmatpush.bf16.xpose.msra.mxu0 0
        %1071 = vmatpush.bf16.xpose.msra.mxu0 0
        %1072 = vmatpush.bf16.xpose.msra.mxu0 %v1063
        %1073 = vmatmul.bf16.gmra.mxu0 %v1060
        %v1074 = vpop.f32.mrf.mxu0
        %v1075 = vadd.f32 %v405, %v1074
        %v1076 = vpop.f32.mrf.mxu0
        %1077 = vdwg.mxu0
        %v1078 = vsel %vm504, %v1075, -inf
        %1079 = vmax.xlane.f32.xlu0 %v1078
        %v1080 = vpop.xlane.xlu0 %1079
        %v1081 = vsub.f32 %v1075, %v1080
        %v1082 = vmul.f32 %v1081, 1.442695
        %v1083 = vpow.pop %v1082
        %v1084 = vsel %vm504, %v1083, 0.0
        %1085 = vadd.xlane.f32.xlu0 %v1084
        %v1086 = vpop.xlane.xlu0 %1085
        %v1087 = vrcp.pop %v1086
        %v1088 = vmul.f32 %v1083, %v1087
        %v1089 = vpack.c.bf16 %v1088, %v1088
        %1090 = vrot.lane.b32.xlu0 %v999, 56
        %v1091 = vpop.permute.xlu0 %1090
        %v1093 = vsel %vm504, %v1089, 0
        %v1096 = vsel %vm541, %v1091, 0
        %1098 = vmatpush.bf16.msra.mxu0 0
        %1099 = vmatpush.bf16.msra.mxu0 0
        %1100 = vmatpush.bf16.msra.mxu0 0
        %1101 = vmatpush.bf16.msra.mxu0 0
        %1102 = vmatpush.bf16.msra.mxu0 0
        %1103 = vmatpush.bf16.msra.mxu0 0
        %1104 = vmatpush.bf16.msra.mxu0 0
        %1105 = vmatpush.bf16.msra.mxu0 %v1096
        %1106 = vmatmul.bf16.gmra.mxu0 %v1093
        %v1107 = vpop.f32.mrf.mxu0
        %v1108 = vadd.f32 0.0, %v1107
        %v1109 = vpop.f32.mrf.mxu0
        %1110 = vdwg.mxu0
        %1112 = vrot.lane.b32.xlu0 %v1108, 8
        %v1113 = vpop.permute.xlu0 %1112
        %1115 = vst.msk [vmem:[#allocation2] sm:$0xff] %vm619, %v1113
        %1116 = vrot.lane.b32.xlu0 %v999, 112
        %v1117 = vpop.permute.xlu0 %1116
        %1118 = vrot.lane.b32.xlu0 %v999, 80
        %v1119 = vpop.permute.xlu0 %1118
        %v1121 = vsel %vm504, %v1117, 0
        %v1124 = vsel %vm504, %v1119, 0
        %1126 = vmatpush.bf16.xpose.msra.mxu0 0
        %1127 = vmatpush.bf16.xpose.msra.mxu0 0
        %1128 = vmatpush.bf16.xpose.msra.mxu0 0
        %1129 = vmatpush.bf16.xpose.msra.mxu0 0
        %1130 = vmatpush.bf16.xpose.msra.mxu0 0
        %1131 = vmatpush.bf16.xpose.msra.mxu0 0
        %1132 = vmatpush.bf16.xpose.msra.mxu0 0
        %1133 = vmatpush.bf16.xpose.msra.mxu0 %v1124
        %1134 = vmatmul.bf16.gmra.mxu0 %v1121
        %v1135 = vpop.f32.mrf.mxu0
        %v1136 = vadd.f32 %v405, %v1135
        %v1137 = vpop.f32.mrf.mxu0
        %1138 = vdwg.mxu0
        %v1139 = vsel %vm504, %v1136, -inf
        %1140 = vmax.xlane.f32.xlu0 %v1139
        %v1141 = vpop.xlane.xlu0 %1140
        %v1142 = vsub.f32 %v1136, %v1141
        %v1143 = vmul.f32 %v1142, 1.442695
        %v1144 = vpow.pop %v1143
        %v1145 = vsel %vm504, %v1144, 0.0
        %1146 = vadd.xlane.f32.xlu0 %v1145
        %v1147 = vpop.xlane.xlu0 %1146
        %v1148 = vrcp.pop %v1147
        %v1149 = vmul.f32 %v1144, %v1148
        %v1150 = vpack.c.bf16 %v1149, %v1149
        %1151 = vrot.lane.b32.xlu0 %v999, 48
        %v1152 = vpop.permute.xlu0 %1151
        %v1154 = vsel %vm504, %v1150, 0
        %v1157 = vsel %vm541, %v1152, 0
        %1159 = vmatpush.bf16.msra.mxu0 0
        %1160 = vmatpush.bf16.msra.mxu0 0
        %1161 = vmatpush.bf16.msra.mxu0 0
        %1162 = vmatpush.bf16.msra.mxu0 0
        %1163 = vmatpush.bf16.msra.mxu0 0
        %1164 = vmatpush.bf16.msra.mxu0 0
        %1165 = vmatpush.bf16.msra.mxu0 0
        %1166 = vmatpush.bf16.msra.mxu0 %v1157
        %1167 = vmatmul.bf16.gmra.mxu0 %v1154
        %v1168 = vpop.f32.mrf.mxu0
        %v1169 = vadd.f32 0.0, %v1168
        %v1170 = vpop.f32.mrf.mxu0
        %1171 = vdwg.mxu0
        %1173 = vrot.lane.b32.xlu0 %v1169, 16
        %v1174 = vpop.permute.xlu0 %1173
        %1176 = vst.msk [vmem:[#allocation2] sm:$0xff] %vm681, %v1174
        %1177 = vrot.lane.b32.xlu0 %v999, 104
        %v1178 = vpop.permute.xlu0 %1177
        %1179 = vrot.lane.b32.xlu0 %v999, 72
        %v1180 = vpop.permute.xlu0 %1179
        %v1182 = vsel %vm504, %v1178, 0
        %v1185 = vsel %vm504, %v1180, 0
        %1187 = vmatpush.bf16.xpose.msra.mxu0 0
        %1188 = vmatpush.bf16.xpose.msra.mxu0 0
        %1189 = vmatpush.bf16.xpose.msra.mxu0 0
        %1190 = vmatpush.bf16.xpose.msra.mxu0 0
        %1191 = vmatpush.bf16.xpose.msra.mxu0 0
        %1192 = vmatpush.bf16.xpose.msra.mxu0 0
        %1193 = vmatpush.bf16.xpose.msra.mxu0 0
        %1194 = vmatpush.bf16.xpose.msra.mxu0 %v1185
        %1195 = vmatmul.bf16.gmra.mxu0 %v1182
        %v1196 = vpop.f32.mrf.mxu0
        %v1197 = vadd.f32 %v405, %v1196
        %v1198 = vpop.f32.mrf.mxu0
        %1199 = vdwg.mxu0
        %v1200 = vsel %vm504, %v1197, -inf
        %1201 = vmax.xlane.f32.xlu0 %v1200
        %v1202 = vpop.xlane.xlu0 %1201
        %v1203 = vsub.f32 %v1197, %v1202
        %v1204 = vmul.f32 %v1203, 1.442695
        %v1205 = vpow.pop %v1204
        %v1206 = vsel %vm504, %v1205, 0.0
        %1207 = vadd.xlane.f32.xlu0 %v1206
        %v1208 = vpop.xlane.xlu0 %1207
        %v1209 = vrcp.pop %v1208
        %v1210 = vmul.f32 %v1205, %v1209
        %v1211 = vpack.c.bf16 %v1210, %v1210
        %1212 = vrot.lane.b32.xlu0 %v999, 40
        %v1213 = vpop.permute.xlu0 %1212
        %v1215 = vsel %vm504, %v1211, 0
        %v1218 = vsel %vm541, %v1213, 0
        %1220 = vmatpush.bf16.msra.mxu0 0
        %1221 = vmatpush.bf16.msra.mxu0 0
        %1222 = vmatpush.bf16.msra.mxu0 0
        %1223 = vmatpush.bf16.msra.mxu0 0
        %1224 = vmatpush.bf16.msra.mxu0 0
        %1225 = vmatpush.bf16.msra.mxu0 0
        %1226 = vmatpush.bf16.msra.mxu0 0
        %1227 = vmatpush.bf16.msra.mxu0 %v1218
        %1228 = vmatmul.bf16.gmra.mxu0 %v1215
        %v1229 = vpop.f32.mrf.mxu0
        %v1230 = vadd.f32 0.0, %v1229
        %v1231 = vpop.f32.mrf.mxu0
        %1232 = vdwg.mxu0
        %1234 = vrot.lane.b32.xlu0 %v1230, 24
        %v1235 = vpop.permute.xlu0 %1234
        %1237 = vst.msk [vmem:[#allocation2] sm:$0xff] %vm743, %v1235
        %v1238 = vld [vmem:[#allocation2] sm:$0xff]
        %v1239 = vpack.c.bf16 %v1238, %v1238
        %v1244 = vunpack.c.l.b16 %v921
        %v1245 = vunpack.c.l.b16 %v922
        %v1246 = vunpack.c.l.b16 %v923
        %v1247 = vunpack.c.l.b16 %v924
        %v1248 = vpack.c.b16 %v1245, %v1244
        %v1249 = vpack.c.b16 %v1247, %v1246
        %v1253 = vsel %vm419, %v1239, 0
        %1255 = vmatpush.bf16.msra.mxu0 0
        %1256 = vmatpush.bf16.msra.mxu0 0
        %1257 = vmatpush.bf16.msra.mxu0 0
        %1258 = vmatpush.bf16.msra.mxu0 0
        %1259 = vmatpush.bf16.msra.mxu0 0
        %1260 = vmatpush.bf16.msra.mxu0 0
        %1261 = vmatpush.bf16.msra.mxu0 %v1249
        %1262 = vmatpush.bf16.msra.mxu0 %v1248
        %1263 = vmatmul.bf16.gmra.mxu0 %v1253
        %v1264 = vpop.f32.mrf.mxu0
        %v1265 = vadd.f32 0.0, %v1264
        %v1266 = vpop.f32.mrf.mxu0
        %1267 = vdwg.mxu0
        %v1268 = vadd.f32 %v910, %v1265
        %v1269 = vsel %vm419, %v1268, 0.0
        %1270 = vadd.xlane.f32.xlu0 %v1269
        %v1271 = vpop.xlane.xlu0 %1270
        %v1272 = vmul.f32 %v1271, %v429
        %v1273 = vsub.f32 %v1268, %v1272
        %v1274 = vmul.f32 %v1273, %v1273
        %v1275 = vsel %vm419, %v1274, 0.0
        %1276 = vadd.xlane.f32.xlu0 %v1275
        %v1277 = vpop.xlane.xlu0 %1276
        %v1278 = vmul.f32 %v1277, 0.032258064
        %v1279 = vstv %s913
        %v1280 = vmul.f32 %v1279, %v1273
        %v1281 = vrsqrt.pop %v1278
        %v1282 = vmul.f32 %v1281, %v1278
        %v1283 = vmul.f32 %v1282, %v1281
        %v1284 = vmul.f32 0.5, %v1283
        %v1285 = vsub.f32 1.5, %v1284
        %v1286 = vmul.f32 %v1281, %v1285
        %v1287 = vmul.f32 %v1278, %v1286
        %vm1288 = vcmp.eq.f32.partialorder %v1278, inf
        %v1289 = vsel %vm1288, %v1278, %v1287
        %vm1290 = vcmp.eq.f32.partialorder %v1278, 0.0
        %v1291 = vand.u32 %v1278, 2147483648
        %v1292 = vsel %vm1290, %v1291, %v1289
        %v1293 = vadd.f32 %v1292, 1e-06
        %v1294 = vrcp.pop %v1293
        %v1295 = vmul.f32 %v1293, %v1294
        %v1296 = vsub.f32 1.0, %v1295
        %v1297 = vmul.f32 %v1294, %v1296
        %v1298 = vadd.f32 %v1294, %v1297
        %vm1299 = vweird.f32 %v1293
        %vm1300 = vweird.f32 %v1294
        %vm1301 = vmor %vm1299, %vm1300
        %v1302 = vsel %vm1301, %v1294, %v1298
        %v1303 = vand.u32 2147483647, %v1293
        %vm1304 = vcmp.eq.f32.partialorder %v1303, 8.507059e+37
        %v1305 = vand.u32 %v1293, 2147483648
        %v1306 = vor.u32 1.1754944e-38, %v1305
        %v1307 = vsel %vm1304, %v1306, %v1302
        %v1308 = vmul.f32 %v1280, %v1307
        %v1309 = vstv %s914
        %v1310 = vadd.f32 %v1308, %v1309
        %v1311 = vpack.c.bf16 %v1310, %v1310
        %s1312 = scalar_lea.vmem %s4, 16
        %v1313 = vld [vmem:[%s1312] sm:$0xf]
        %v1314 = vld [vmem:[%s1312 + $0x4] sm:$0xf]
        %v1315 = vld [vmem:[%s1312 + $0x8] sm:$0xf]
        %v1316 = vld [vmem:[%s1312 + $0xc] sm:$0xf]
        %s1317 = scalar_lea.vmem %s5, 1
        %v1318 = vld [vmem:[%s1317] sm:$0x1]
        %v1320 = vperm.slane %v1318, 0
        %v1326 = vunpack.c.l.b16 %v1313
        %v1327 = vunpack.c.l.b16 %v1314
        %v1328 = vunpack.c.l.b16 %v1315
        %v1329 = vunpack.c.l.b16 %v1316
        %v1330 = vpack.c.b16 %v1327, %v1326
        %v1331 = vpack.c.b16 %v1329, %v1328
        %v1335 = vsel %vm419, %v1311, 0
        %1337 = vmatpush.bf16.msra.mxu0 0
        %1338 = vmatpush.bf16.msra.mxu0 0
        %1339 = vmatpush.bf16.msra.mxu0 0
        %1340 = vmatpush.bf16.msra.mxu0 0
        %1341 = vmatpush.bf16.msra.mxu0 0
        %1342 = vmatpush.bf16.msra.mxu0 0
        %1343 = vmatpush.bf16.msra.mxu0 %v1331
        %1344 = vmatpush.bf16.msra.mxu0 %v1330
        %1345 = vmatmul.bf16.gmra.mxu0 %v1335
        %v1346 = vpop.f32.mrf.mxu0
        %v1347 = vadd.f32 %v1320, %v1346
        %v1348 = vpop.f32.mrf.mxu0
        %1349 = vdwg.mxu0
        %v1350 = vmax.f32 %v1347, 0.0
        %v1351 = vpack.c.bf16 %v1350, %v1350
        %s1352 = scalar_lea.vmem %s6, 32
        %v1353 = vld [vmem:[%s1352] sm:$0xf]
        %v1354 = vld [vmem:[%s1352 + $0x4] sm:$0xf]
        %v1355 = vld [vmem:[%s1352 + $0x8] sm:$0xf]
        %v1356 = vld [vmem:[%s1352 + $0xc] sm:$0xf]
        %v1357 = vld [vmem:[%s1352 + $0x10] sm:$0xf]
        %v1358 = vld [vmem:[%s1352 + $0x14] sm:$0xf]
        %v1359 = vld [vmem:[%s1352 + $0x18] sm:$0xf]
        %v1360 = vld [vmem:[%s1352 + $0x1c] sm:$0xf]
        %s1361 = scalar_lea.vmem %s7, 1
        %v1362 = vld [vmem:[%s1361] sm:$0x1]
        %v1364 = vperm.slane %v1362, 0
        %v1374 = vunpack.c.l.b16 %v1353
        %v1375 = vunpack.c.l.b16 %v1354
        %v1376 = vunpack.c.l.b16 %v1355
        %v1377 = vunpack.c.l.b16 %v1356
        %v1378 = vunpack.c.l.b16 %v1357
        %v1379 = vunpack.c.l.b16 %v1358
        %v1380 = vunpack.c.l.b16 %v1359
        %v1381 = vunpack.c.l.b16 %v1360
        %v1382 = vpack.c.b16 %v1375, %v1374
        %v1383 = vpack.c.b16 %v1377, %v1376
        %v1384 = vpack.c.b16 %v1379, %v1378
        %v1385 = vpack.c.b16 %v1381, %v1380
        %v1391 = vsel %vm893, %v1351, 0
        %1393 = vmatpush.bf16.msra.mxu0 0
        %1394 = vmatpush.bf16.msra.mxu0 0
        %1395 = vmatpush.bf16.msra.mxu0 0
        %1396 = vmatpush.bf16.msra.mxu0 0
        %1397 = vmatpush.bf16.msra.mxu0 %v1385
        %1398 = vmatpush.bf16.msra.mxu0 %v1384
        %1399 = vmatpush.bf16.msra.mxu0 %v1383
        %1400 = vmatpush.bf16.msra.mxu0 %v1382
        %1401 = vmatmul.bf16.gmra.mxu0 %v1391
        %v1402 = vpop.f32.mrf.mxu0
        %v1403 = vadd.f32 %v1364, %v1402
        %v1404 = vpop.f32.mrf.mxu0
        %1405 = vdwg.mxu0
        %v1406 = vadd.f32 %v1268, %v1403
        %s1407 = sld [smem:[#allocation9 + $0x8]]
        %s1408 = sld [smem:[#allocation9 + $0x9]]
        %v1409 = vsel %vm419, %v1406, 0.0
        %1410 = vadd.xlane.f32.xlu0 %v1409
        %v1411 = vpop.xlane.xlu0 %1410
        %v1412 = vmul.f32 %v1411, %v429
        %v1413 = vsub.f32 %v1406, %v1412
        %v1414 = vmul.f32 %v1413, %v1413
        %v1415 = vsel %vm419, %v1414, 0.0
        %1416 = vadd.xlane.f32.xlu0 %v1415
        %v1417 = vpop.xlane.xlu0 %1416
        %v1418 = vmul.f32 %v1417, 0.032258064
        %v1419 = vstv %s1407
        %v1420 = vmul.f32 %v1419, %v1413
        %v1421 = vrsqrt.pop %v1418
        %v1422 = vmul.f32 %v1421, %v1418
        %v1423 = vmul.f32 %v1422, %v1421
        %v1424 = vmul.f32 0.5, %v1423
        %v1425 = vsub.f32 1.5, %v1424
        %v1426 = vmul.f32 %v1421, %v1425
        %v1427 = vmul.f32 %v1418, %v1426
        %vm1428 = vcmp.eq.f32.partialorder %v1418, inf
        %v1429 = vsel %vm1428, %v1418, %v1427
        %vm1430 = vcmp.eq.f32.partialorder %v1418, 0.0
        %v1431 = vand.u32 %v1418, 2147483648
        %v1432 = vsel %vm1430, %v1431, %v1429
        %v1433 = vadd.f32 %v1432, 1e-06
        %v1434 = vrcp.pop %v1433
        %v1435 = vmul.f32 %v1433, %v1434
        %v1436 = vsub.f32 1.0, %v1435
        %v1437 = vmul.f32 %v1434, %v1436
        %v1438 = vadd.f32 %v1434, %v1437
        %vm1439 = vweird.f32 %v1433
        %vm1440 = vweird.f32 %v1434
        %vm1441 = vmor %vm1439, %vm1440
        %v1442 = vsel %vm1441, %v1434, %v1438
        %v1443 = vand.u32 2147483647, %v1433
        %vm1444 = vcmp.eq.f32.partialorder %v1443, 8.507059e+37
        %v1445 = vand.u32 %v1433, 2147483648
        %v1446 = vor.u32 1.1754944e-38, %v1445
        %v1447 = vsel %vm1444, %v1446, %v1442
        %v1448 = vmul.f32 %v1420, %v1447
        %v1449 = vstv %s1408
        %v1450 = vadd.f32 %v1448, %v1449
        %1451 = vst.msk [vmem:[%s398] sm:$0xff] %vm419, %v1450
        %s1452 = sand.u32 %s237, 1
        %s1453 = scalar_lea.sflag [#allocation5], %s1452
        %s1454 = sand.u32 %s237, 1
        %s1455 = smul.addr %s1454, 8
        %s1456 = scalar_lea.vmem [#allocation10], %s1455
        // Predicated region
        $region69: #{encoder_forward.1} parent=55 // pred_check
          %p1457 = pneg %p247
        $region70: #{encoder_forward.1} parent=55 // pred_check_branch
          %1459 = sbr.rel (%p1457) target = $region72
        $region71: #{encoder_forward.1} parent=55 // pred_region
          %1461 = vsyncadd %s1453, 0
          %s1462 = smul.addr %s30, 8
          %s1463 = scalar_lea.hbm %s9, %s1462
          %s1465 = sshll.u32 %s1456, 4
          %s1466 = int_to_ptr.vmem [resolvable:$true] %s1465
          %s1467 = sshll.u32 %s1463, 4
          %s1468 = int_to_ptr.hbm [resolvable:$true] %s1467
          %1470 = dma.vmem_to_hbm [thread:$0]  %s1466, 128, %s1468, %s1453
        $region72: #{encoder_forward.1} parent=55 // pred_fallthru
          _
      $region56: #{encoder_forward.1} parent=5 // pred_fallthru
        _
      %p1471 = scmp.le.s32.totalorder 2, %s25
      // Predicated region
      $region73: #{encoder_forward.1} parent=5 // pred_check
        %p1472 = pneg %p1471
      $region74: #{encoder_forward.1} parent=5 // pred_check_branch
        %1474 = sbr.rel (%p1472) target = $region76
      $region75: #{encoder_forward.1} parent=5 // pred_region
        %s1475 = ssub.s32 %s25, 2
        // Predicated region
        $region77: #{encoder_forward.1} parent=75 // pred_check
          %p1476 = pneg %p253
        $region78: #{encoder_forward.1} parent=75 // pred_check_branch
          %1478 = sbr.rel (%p1476) target = $region80
        $region79: #{encoder_forward.1} parent=75 // pred_region
          %s1479 = sand.u32 %s238, 1
          %s1480 = scalar_lea.sflag [#allocation5], %s1479
          %s1481 = sand.u32 %s238, 1
          %s1482 = smul.addr %s1481, 8
          %s1483 = scalar_lea.vmem [#allocation10], %s1482
          %1485 = dma.done %s1480, 128
        $region80: #{encoder_forward.1} parent=75 // pred_fallthru
          _
      $region76: #{encoder_forward.1} parent=5 // pred_fallthru
        _
    $region6: #{encoder_forward.1} parent=1 // loop_footer
      %s29 = sadd.s32 1, %s25
    $region7: #{encoder_forward.1} parent=1 // loop_footer_branch
      %24 = sbr.rel target = $region3
    $region8: #{encoder_forward.1} parent=1 // loop_exit
      _
    %1486 = vsyncpa [#allocation4], 1
    %s1487 = scalar_lea.sflag [#allocation4], 1
    %1488 = vsyncpa %s1487, 1
    %1489 = vsyncpa [#allocation8], 1
    %s1490 = scalar_lea.sflag [#allocation8], 1
    %1491 = vsyncpa %s1490, 1
    %1492 = vsyncpa [#allocation5], 1
    %s1493 = scalar_lea.sflag [#allocation5], 1
    %1494 = vsyncpa %s1493, 1
    %1495 = vsyncpa [#allocation6], 1
    %s1496 = scalar_lea.sflag [#allocation6], 1
    %1497 = vsyncpa %s1496, 1

</llo_original>
